<compile_context>
chip_gen: v7x
topology: tpu7x:2x2x1
jax: 0.10.0
libtpu: 0.0.40
codegen_flags: <defaults>
</compile_context>

<pallas_src>
import math
from functools import partial

import jax
import jax.numpy as jnp
from jax import lax
from jax.experimental import pallas as pl
from jax.experimental.pallas import tpu as pltpu


# ----------------------------------------------------------------------------
# helpers
# ----------------------------------------------------------------------------
def _round_up(x, m):
    return (x + m - 1) // m * m


def _sublane(dtype):
    # minimum second-minor granularity: 8 for 32-bit, 16 for bf16
    return 16 if jnp.dtype(dtype) == jnp.dtype(jnp.bfloat16) else 8


def _pick_tile(dim, preferred, granularity):
    """Largest tile <= preferred that is a multiple of `granularity` and evenly
    divides `dim`; falls back to the full extent (block == array dim is always
    legal w.r.t. the (8, 128) rule)."""
    if dim <= preferred:
        return dim
    t = (preferred // granularity) * granularity
    while t >= granularity:
        if dim % t == 0:
            return t
        t -= granularity
    return dim


# ----------------------------------------------------------------------------
# Kernel 1: tiled dense layer  y = x @ W + b
# ----------------------------------------------------------------------------
def _linear_kernel(x_ref, w_ref, b_ref, o_ref, acc_ref):
    @pl.when(pl.program_id(2) == 0)
    def _init():
        acc_ref[...] = jnp.zeros_like(acc_ref)

    acc_ref[...] += jnp.dot(x_ref[...], w_ref[...],
                            preferred_element_type=jnp.float32)

    @pl.when(pl.program_id(2) == pl.num_programs(2) - 1)
    def _finalize():
        # bias added exactly once, on the final K step
        o_ref[...] = (acc_ref[...] + b_ref[...].astype(jnp.float32)).astype(o_ref.dtype)


def linear(x2d, w, b, *, tm_pref=512, tn_pref=512, tk_pref=1024):
    """x2d: (M, K), w: (K, N), b: (N,) -> (M, N).

    M is padded up to the row tile (never shrunk to a tiny tile); N/K tiles are
    128-multiples when the dims allow, full extent otherwise."""
    M, K = x2d.shape
    K2, N = w.shape
    assert K == K2
    sub = _sublane(x2d.dtype)
    tm = tm_pref if M >= tm_pref else _round_up(M, sub)
    Mp = _round_up(M, tm)
    if Mp != M:
        x2d = jnp.pad(x2d, ((0, Mp - M), (0, 0)))
    tn = _pick_tile(N, tn_pref, 128)
    tk = _pick_tile(K, tk_pref, 128)
    grid = (Mp // tm, N // tn, K // tk)
    b2d = b.reshape(1, N)

    out = pl.pallas_call(
        _linear_kernel,
        out_shape=jax.ShapeDtypeStruct((Mp, N), x2d.dtype),
        grid_spec=pltpu.PrefetchScalarGridSpec(
            num_scalar_prefetch=0,
            grid=grid,
            in_specs=[
                pl.BlockSpec((tm, tk), lambda i, j, k: (i, k)),
                pl.BlockSpec((tk, tn), lambda i, j, k: (k, j)),
                pl.BlockSpec((1, tn), lambda i, j, k: (0, j)),
            ],
            out_specs=pl.BlockSpec((tm, tn), lambda i, j, k: (i, j)),
            scratch_shapes=[pltpu.VMEM((tm, tn), jnp.float32)],
        ),
        compiler_params=pltpu.CompilerParams(
            dimension_semantics=("parallel", "parallel", "arbitrary"),
            vmem_limit_bytes=32 * 1024 * 1024),
    )(x2d, w, b2d)
    return out[:M] if Mp != M else out


# ----------------------------------------------------------------------------
# Kernel 2: flash-style attention over the group-major fused qkv activation
# ----------------------------------------------------------------------------
def _choose_head_group(d_model, head_dim):
    """Smallest multiple of head_dim that is a multiple of 128 and divides
    d_model (lane-dense stores / MXU output); falls back to d_model."""
    g = head_dim
    while g <= d_model:
        if g % 128 == 0 and d_model % g == 0:
            return g
        g += head_dim
    return d_model


def _make_flash_kernel(heads_per_group, head_dim):
    gh, dh = heads_per_group, head_dim

    def kernel(q_ref, k_ref, v_ref, o_ref, m_ref, l_ref, acc_ref):
        # q_ref: (tq, gh*dh), k_ref/v_ref: (tk, gh*dh), o_ref: (tq, gh*dh)
        ki = pl.program_id(3)

        @pl.when(ki == 0)
        def _init():
            m_ref[...] = jnp.full(m_ref.shape, -jnp.inf, dtype=m_ref.dtype)
            l_ref[...] = jnp.zeros(l_ref.shape, dtype=l_ref.dtype)
            acc_ref[...] = jnp.zeros(acc_ref.shape, dtype=acc_ref.dtype)

        # gh == 1 in the lane-aligned case (head_dim >= 128): no in-kernel
        # slicing at all.  For small head_dim the group is at most a handful
        # of heads, and liveness is bounded to one (tq, tk) score tile.
        for h in range(gh):
            if gh == 1:
                q, k, v = q_ref[...], k_ref[...], v_ref[...]
            else:
                lo = h * dh
                q = q_ref[:, lo:lo + dh]
                k = k_ref[:, lo:lo + dh]
                v = v_ref[:, lo:lo + dh]
            # 1/sqrt(dh) already folded into the Q weights.  QK^T without a
            # materialized transpose: contract the shared last dim on the MXU.
            s = lax.dot_general(q, k, (((1,), (1,)), ((), ())),
                                preferred_element_type=jnp.float32)      # (tq, tk)
            m_prev = m_ref[h]                                            # (tq, 1)
            m_new = jnp.maximum(m_prev, jnp.max(s, axis=-1, keepdims=True))
            alpha = jnp.exp(m_prev - m_new)
            p = jnp.exp(s - m_new)
            l_ref[h] = alpha * l_ref[h] + jnp.sum(p, axis=-1, keepdims=True)
            acc_ref[h] = alpha * acc_ref[h] + jnp.dot(
                p.astype(v.dtype), v, preferred_element_type=jnp.float32)
            m_ref[h] = m_new

        @pl.when(ki == pl.num_programs(3) - 1)
        def _finalize():
            for h in range(gh):
                inv = pl.reciprocal(l_ref[h], approx=True)               # EUP
                o_h = (acc_ref[h] * inv).astype(o_ref.dtype)
                if gh == 1:
                    o_ref[...] = o_h                  # single lane-dense store
                else:
                    o_ref[:, h * dh:(h + 1) * dh] = o_h   # incremental, no concat

    return kernel


def fused_qkv_flash_attention(qkv, num_heads, head_dim, *, tq_pref=256, tk_pref=512):
    """qkv: (B, S, 3*D) in group-major [Q | K | V] layout with heads contiguous
    inside each section -> (B, S, D) with heads already concatenated.
    # TODO(synk): additive attention-mask support (mask=None in this forward).
    """
    B, S, threeD = qkv.shape
    D = num_heads * head_dim
    G = _choose_head_group(D, head_dim)      # lanes per grid step
    gh = G // head_dim                       # heads per grid step
    NG = D // G                              # head groups
    tq = _pick_tile(S, tq_pref, 128)
    tk = _pick_tile(S, tk_pref, 128)
    grid = (B, NG, S // tq, S // tk)

    if G % 128 == 0:
        # Zero-copy: three lane-aligned views of the fused activation picked
        # purely by the last-axis block index (group-major layout => Q group g
        # is block g, K group g is block NG+g, V group g is block 2*NG+g).
        operands = (qkv, qkv, qkv)
        q_spec = pl.BlockSpec((None, tq, G), lambda b, g, qi, ki: (b, qi, g))
        k_spec = pl.BlockSpec((None, tk, G), lambda b, g, qi, ki: (b, ki, NG + g))
        v_spec = pl.BlockSpec((None, tk, G), lambda b, g, qi, ki: (b, ki, 2 * NG + g))
    else:
        # Small d_model fallback (e.g. the unit test): split once host-side so
        # each block's last dim equals the full array extent (always legal).
        q, k, v = jnp.split(qkv, 3, axis=-1)
        operands = (q, k, v)
        q_spec = pl.BlockSpec((None, tq, G), lambda b, g, qi, ki: (b, qi, g))
        k_spec = pl.BlockSpec((None, tk, G), lambda b, g, qi, ki: (b, ki, g))
        v_spec = pl.BlockSpec((None, tk, G), lambda b, g, qi, ki: (b, ki, g))

    return pl.pallas_call(
        _make_flash_kernel(gh, head_dim),
        out_shape=jax.ShapeDtypeStruct((B, S, D), qkv.dtype),
        grid_spec=pltpu.PrefetchScalarGridSpec(
            num_scalar_prefetch=0,
            grid=grid,
            in_specs=[q_spec, k_spec, v_spec],
            out_specs=pl.BlockSpec((None, tq, G), lambda b, g, qi, ki: (b, qi, g)),
            scratch_shapes=[
                pltpu.VMEM((gh, tq, 1), jnp.float32),         # running max
                pltpu.VMEM((gh, tq, 1), jnp.float32),         # running sum
                pltpu.VMEM((gh, tq, head_dim), jnp.float32),  # output accumulator
            ],
        ),
        compiler_params=pltpu.CompilerParams(
            dimension_semantics=("parallel", "parallel", "parallel", "arbitrary"),
            vmem_limit_bytes=32 * 1024 * 1024),
    )(*operands)


# ----------------------------------------------------------------------------
# One-time parameter preparation (host side, outside the hot path)
# ----------------------------------------------------------------------------
def prepare_params(w_qkv, b_qkv, w_out, b_out, num_heads):
    """Permute the qkv projection columns from the module's per-head
    interleaved layout to group-major [Q_allheads | K_allheads | V_allheads]
    (heads contiguous inside each section) and fold 1/sqrt(head_dim) into the
    Q columns/bias.  w_qkv is (d_model, 3*d_model) with y = x @ w_qkv + b."""
    d_model = w_out.shape[0]
    dh = d_model // num_heads
    col = jnp.arange(3 * d_model)
    sec = col // d_model            # 0=Q, 1=K, 2=V in the new layout
    rem = col % d_model
    head = rem // dh
    d = rem % dh
    src = head * (3 * dh) + sec * dh + d      # column in the original layout
    scale = jnp.where(sec == 0, 1.0 / math.sqrt(dh), 1.0).astype(jnp.float32)
    w_qkv_g = (w_qkv[:, src] * scale[None, :]).astype(w_qkv.dtype)
    b_qkv_g = (b_qkv[src] * scale).astype(b_qkv.dtype)
    return w_qkv_g, b_qkv_g, w_out, b_out


# ----------------------------------------------------------------------------
# MultiHeadAttention forward
# ----------------------------------------------------------------------------
@partial(jax.jit, static_argnums=(2, 3))
def multi_head_attention(x, params, num_heads, compute_dtype=None):
    """params must come from prepare_params().  compute_dtype=jnp.bfloat16
    feeds the MXU bf16 operands (f32 accumulation) for v5e/v6e peak."""
    B, S, D = x.shape
    dh = D // num_heads
    w_qkv, b_qkv, w_out, b_out = params
    if compute_dtype is not None:
        x = x.astype(compute_dtype)
        w_qkv = w_qkv.astype(compute_dtype)
        b_qkv = b_qkv.astype(compute_dtype)
        w_out = w_out.astype(compute_dtype)
        b_out = b_out.astype(compute_dtype)

    qkv = linear(x.reshape(B * S, D), w_qkv, b_qkv)                       # (B*S, 3D)
    attn = fused_qkv_flash_attention(qkv.reshape(B, S, 3 * D), num_heads, dh)  # (B, S, D)
    out = linear(attn.reshape(B * S, D), w_out, b_out)                    # (B*S, D)
    return out.reshape(B, S, D)


def reference_mha(x, params, num_heads):
    """Pure-JAX reference of the PyTorch forward (original parameter layout)."""
    B, S, D = x.shape
    dh = D // num_heads
    w_qkv, b_qkv, w_out, b_out = params
    qkv = x @ w_qkv + b_qkv
    qkv = qkv.reshape(B, S, num_heads, 3 * dh).transpose(0, 2, 1, 3)
    q, k, v = jnp.split(qkv, 3, axis=-1)
    s = jnp.einsum("bhqd,bhkd->bhqk", q, k) / math.sqrt(dh)
    p = jax.nn.softmax(s, axis=-1)
    o = jnp.einsum("bhqk,bhkd->bhqd", p, v)
    o = o.transpose(0, 2, 1, 3).reshape(B, S, D)
    return o @ w_out + b_out


if __name__ == "__main__":
    # Small shapes consistent with the module's forward.
    B, S, D, H = 2, 8, 32, 4

    key = jax.random.PRNGKey(0)
    k1, k2, k3, k4, k5 = jax.random.split(key, 5)

    bound = 1.0 / math.sqrt(D)
    w_qkv = jax.random.uniform(k1, (D, 3 * D), jnp.float32, -bound, bound)
    b_qkv = jax.random.uniform(k2, (3 * D,), jnp.float32, -bound, bound)
    w_out = jax.random.uniform(k3, (D, D), jnp.float32, -bound, bound)
    b_out = jax.random.uniform(k4, (D,), jnp.float32, -bound, bound)
    x = jax.random.normal(k5, (B, S, D), jnp.float32)

    params = prepare_params(w_qkv, b_qkv, w_out, b_out, H)
    ref = jax.block_until_ready(reference_mha(x, (w_qkv, b_qkv, w_out, b_out), H))

    # f32 path
    out = jax.block_until_ready(multi_head_attention(x, params, H))
    assert out.shape == (B, S, D)
    max_err = float(jnp.max(jnp.abs(out - ref)))
    # slightly relaxed tolerance: softmax denominator uses the EUP approximate
    # reciprocal (pl.reciprocal(approx=True)).
    assert jnp.allclose(out, ref, atol=2e-3, rtol=2e-3), (
        f"f32 mismatch vs reference (max abs err {max_err})")

    # bf16 MXU-feed path (v5e/v6e peak; on v7x quantized weights should use fp8)
    out_bf16 = jax.block_until_ready(
        multi_head_attention(x, params, H, jnp.bfloat16))
    max_err_bf16 = float(jnp.max(jnp.abs(out_bf16.astype(jnp.float32) - ref)))
    assert jnp.allclose(out_bf16.astype(jnp.float32), ref, atol=1e-1, rtol=1e-1), (
        f"bf16 mismatch vs reference (max abs err {max_err_bf16})")

    print("KERNEL_OK")
</pallas_src>

<mosaic_0001>
module attributes {stable_mosaic.version = 11 : i64} {
  func.func @_linear_kernel(%arg0: i32, %arg1: i32, %arg2: i32, %arg3: memref<16x32xf32, #tpu.memory_space<vmem>>, %arg4: memref<32x32xf32, #tpu.memory_space<vmem>>, %arg5: memref<1x32xf32, #tpu.memory_space<vmem>>, %arg6: memref<16x32xf32, #tpu.memory_space<vmem>>, %arg7: memref<16x32xf32, #tpu.memory_space<vmem>>) attributes {dimension_semantics = [#tpu.dimension_semantics<parallel>, #tpu.dimension_semantics<parallel>, #tpu.dimension_semantics<arbitrary>], iteration_bounds = array<i64: 1, 1, 1>, scalar_prefetch = 0 : i64, scratch_operands = 1 : i64, tpu.core_type = #tpu.core_type<tc>, window_params = [{transform_indices = @transform_0, window_bounds = array<i64: 16, 32>}, {transform_indices = @transform_1, window_bounds = array<i64: 32, 32>}, {transform_indices = @transform_2, window_bounds = array<i64: 1, 32>}, {transform_indices = @transform_3, window_bounds = array<i64: 16, 32>}]} {
    %c0_i32 = arith.constant 0 : i32
    %0 = arith.cmpi eq, %arg2, %c0_i32 : i32
    %1 = arith.extui %0 : i1 to i32
    %c0_i32_0 = arith.constant 0 : i32
    %2 = arith.cmpi ne, %1, %c0_i32_0 : i32
    scf.if %2 {
      %cst_10 = arith.constant 0.000000e+00 : f32
      %12 = vector.broadcast %cst_10 : f32 to vector<16x32xf32>
      %c0_11 = arith.constant 0 : index
      %c0_12 = arith.constant 0 : index
      %13 = vector.load %arg7[%c0_11, %c0_12] : memref<16x32xf32, #tpu.memory_space<vmem>>, vector<16x32xf32>
      tpu.vector_store %arg7[%c0_11, %c0_12], %12 {strides = array<i32>} : memref<16x32xf32, #tpu.memory_space<vmem>>, vector<16x32xf32>,
    } else {
    }
    %c0 = arith.constant 0 : index
    %c0_1 = arith.constant 0 : index
    %3 = vector.load %arg7[%c0, %c0_1] : memref<16x32xf32, #tpu.memory_space<vmem>>, vector<16x32xf32>
    %c0_2 = arith.constant 0 : index
    %c0_3 = arith.constant 0 : index
    %4 = vector.load %arg3[%c0_2, %c0_3] : memref<16x32xf32, #tpu.memory_space<vmem>>, vector<16x32xf32>
    %c0_4 = arith.constant 0 : index
    %c0_5 = arith.constant 0 : index
    %5 = vector.load %arg4[%c0_4, %c0_5] : memref<32x32xf32, #tpu.memory_space<vmem>>, vector<32x32xf32>
    %cst = arith.constant dense<0.000000e+00> : vector<16x32xf32>
    %6 = tpu.matmul %4, %5, %cst {dimension_numbers = #tpu.dot_dimension_numbers<[1], [0], [0], [1], [0, 0, 1, 1], [], []>} : vector<16x32xf32>, vector<32x32xf32>, vector<16x32xf32> -> vector<16x32xf32>
    %7 = arith.addf %3, %6 : vector<16x32xf32>
    %c0_6 = arith.constant 0 : index
    %c0_7 = arith.constant 0 : index
    %8 = vector.load %arg7[%c0_6, %c0_7] : memref<16x32xf32, #tpu.memory_space<vmem>>, vector<16x32xf32>
    tpu.vector_store %arg7[%c0_6, %c0_7], %7 {strides = array<i32>} : memref<16x32xf32, #tpu.memory_space<vmem>>, vector<16x32xf32>,
    %c0_i32_8 = arith.constant 0 : i32
    %9 = arith.cmpi eq, %arg2, %c0_i32_8 : i32
    %10 = arith.extui %9 : i1 to i32
    %c0_i32_9 = arith.constant 0 : i32
    %11 = arith.cmpi ne, %10, %c0_i32_9 : i32
    scf.if %11 {
      %c0_10 = arith.constant 0 : index
      %c0_11 = arith.constant 0 : index
      %12 = vector.load %arg7[%c0_10, %c0_11] : memref<16x32xf32, #tpu.memory_space<vmem>>, vector<16x32xf32>
      %c0_12 = arith.constant 0 : index
      %c0_13 = arith.constant 0 : index
      %13 = vector.load %arg5[%c0_12, %c0_13] : memref<1x32xf32, #tpu.memory_space<vmem>>, vector<1x32xf32>
      %14 = vector.broadcast %13 : vector<1x32xf32> to vector<16x32xf32>
      %15 = arith.addf %12, %14 : vector<16x32xf32>
      %c0_14 = arith.constant 0 : index
      %c0_15 = arith.constant 0 : index
      %16 = vector.load %arg6[%c0_14, %c0_15] : memref<16x32xf32, #tpu.memory_space<vmem>>, vector<16x32xf32>
      tpu.vector_store %arg6[%c0_14, %c0_15], %15 {strides = array<i32>} : memref<16x32xf32, #tpu.memory_space<vmem>>, vector<16x32xf32>,
    } else {
    }
    return
  }
  func.func @transform_0(%arg0: i32, %arg1: i32, %arg2: i32) -> (i32, i32) {
    %c0_i32 = arith.constant 0 : i32
    return %arg0, %arg2 : i32, i32
  }
  func.func @transform_1(%arg0: i32, %arg1: i32, %arg2: i32) -> (i32, i32) {
    %c0_i32 = arith.constant 0 : i32
    return %arg2, %arg1 : i32, i32
  }
  func.func @transform_2(%arg0: i32, %arg1: i32, %arg2: i32) -> (i32, i32) {
    %c0_i32 = arith.constant 0 : i32
    %c0_i32_0 = arith.constant 0 : i32
    return %c0_i32, %arg1 : i32, i32
  }
  func.func @transform_3(%arg0: i32, %arg1: i32, %arg2: i32) -> (i32, i32) {
    %c0_i32 = arith.constant 0 : i32
    return %arg0, %arg1 : i32, i32
  }
}

module attributes {stable_mosaic.version = 11 : i64} {
  func.func @_linear_kernel(%arg0: i32, %arg1: i32, %arg2: i32, %arg3: memref<16x32xf32, #tpu.memory_space<vmem>>, %arg4: memref<32x96xf32, #tpu.memory_space<vmem>>, %arg5: memref<1x96xf32, #tpu.memory_space<vmem>>, %arg6: memref<16x96xf32, #tpu.memory_space<vmem>>, %arg7: memref<16x96xf32, #tpu.memory_space<vmem>>) attributes {dimension_semantics = [#tpu.dimension_semantics<parallel>, #tpu.dimension_semantics<parallel>, #tpu.dimension_semantics<arbitrary>], iteration_bounds = array<i64: 1, 1, 1>, scalar_prefetch = 0 : i64, scratch_operands = 1 : i64, tpu.core_type = #tpu.core_type<tc>, window_params = [{transform_indices = @transform_0, window_bounds = array<i64: 16, 32>}, {transform_indices = @transform_1, window_bounds = array<i64: 32, 96>}, {transform_indices = @transform_2, window_bounds = array<i64: 1, 96>}, {transform_indices = @transform_3, window_bounds = array<i64: 16, 96>}]} {
    %c0_i32 = arith.constant 0 : i32
    %0 = arith.cmpi eq, %arg2, %c0_i32 : i32
    %1 = arith.extui %0 : i1 to i32
    %c0_i32_0 = arith.constant 0 : i32
    %2 = arith.cmpi ne, %1, %c0_i32_0 : i32
    scf.if %2 {
      %cst_10 = arith.constant 0.000000e+00 : f32
      %12 = vector.broadcast %cst_10 : f32 to vector<16x96xf32>
      %c0_11 = arith.constant 0 : index
      %c0_12 = arith.constant 0 : index
      %13 = vector.load %arg7[%c0_11, %c0_12] : memref<16x96xf32, #tpu.memory_space<vmem>>, vector<16x96xf32>
      tpu.vector_store %arg7[%c0_11, %c0_12], %12 {strides = array<i32>} : memref<16x96xf32, #tpu.memory_space<vmem>>, vector<16x96xf32>,
    } else {
    }
    %c0 = arith.constant 0 : index
    %c0_1 = arith.constant 0 : index
    %3 = vector.load %arg7[%c0, %c0_1] : memref<16x96xf32, #tpu.memory_space<vmem>>, vector<16x96xf32>
    %c0_2 = arith.constant 0 : index
    %c0_3 = arith.constant 0 : index
    %4 = vector.load %arg3[%c0_2, %c0_3] : memref<16x32xf32, #tpu.memory_space<vmem>>, vector<16x32xf32>
    %c0_4 = arith.constant 0 : index
    %c0_5 = arith.constant 0 : index
    %5 = vector.load %arg4[%c0_4, %c0_5] : memref<32x96xf32, #tpu.memory_space<vmem>>, vector<32x96xf32>
    %cst = arith.constant dense<0.000000e+00> : vector<16x96xf32>
    %6 = tpu.matmul %4, %5, %cst {dimension_numbers = #tpu.dot_dimension_numbers<[1], [0], [0], [1], [0, 0, 1, 1], [], []>} : vector<16x32xf32>, vector<32x96xf32>, vector<16x96xf32> -> vector<16x96xf32>
    %7 = arith.addf %3, %6 : vector<16x96xf32>
    %c0_6 = arith.constant 0 : index
    %c0_7 = arith.constant 0 : index
    %8 = vector.load %arg7[%c0_6, %c0_7] : memref<16x96xf32, #tpu.memory_space<vmem>>, vector<16x96xf32>
    tpu.vector_store %arg7[%c0_6, %c0_7], %7 {strides = array<i32>} : memref<16x96xf32, #tpu.memory_space<vmem>>, vector<16x96xf32>,
    %c0_i32_8 = arith.constant 0 : i32
    %9 = arith.cmpi eq, %arg2, %c0_i32_8 : i32
    %10 = arith.extui %9 : i1 to i32
    %c0_i32_9 = arith.constant 0 : i32
    %11 = arith.cmpi ne, %10, %c0_i32_9 : i32
    scf.if %11 {
      %c0_10 = arith.constant 0 : index
      %c0_11 = arith.constant 0 : index
      %12 = vector.load %arg7[%c0_10, %c0_11] : memref<16x96xf32, #tpu.memory_space<vmem>>, vector<16x96xf32>
      %c0_12 = arith.constant 0 : index
      %c0_13 = arith.constant 0 : index
      %13 = vector.load %arg5[%c0_12, %c0_13] : memref<1x96xf32, #tpu.memory_space<vmem>>, vector<1x96xf32>
      %14 = vector.broadcast %13 : vector<1x96xf32> to vector<16x96xf32>
      %15 = arith.addf %12, %14 : vector<16x96xf32>
      %c0_14 = arith.constant 0 : index
      %c0_15 = arith.constant 0 : index
      %16 = vector.load %arg6[%c0_14, %c0_15] : memref<16x96xf32, #tpu.memory_space<vmem>>, vector<16x96xf32>
      tpu.vector_store %arg6[%c0_14, %c0_15], %15 {strides = array<i32>} : memref<16x96xf32, #tpu.memory_space<vmem>>, vector<16x96xf32>,
    } else {
    }
    return
  }
  func.func @transform_0(%arg0: i32, %arg1: i32, %arg2: i32) -> (i32, i32) {
    %c0_i32 = arith.constant 0 : i32
    return %arg0, %arg2 : i32, i32
  }
  func.func @transform_1(%arg0: i32, %arg1: i32, %arg2: i32) -> (i32, i32) {
    %c0_i32 = arith.constant 0 : i32
    return %arg2, %arg1 : i32, i32
  }
  func.func @transform_2(%arg0: i32, %arg1: i32, %arg2: i32) -> (i32, i32) {
    %c0_i32 = arith.constant 0 : i32
    %c0_i32_0 = arith.constant 0 : i32
    return %c0_i32, %arg1 : i32, i32
  }
  func.func @transform_3(%arg0: i32, %arg1: i32, %arg2: i32) -> (i32, i32) {
    %c0_i32 = arith.constant 0 : i32
    return %arg0, %arg1 : i32, i32
  }
}

module attributes {stable_mosaic.version = 11 : i64} {
  func.func @kernel(%arg0: i32, %arg1: i32, %arg2: i32, %arg3: i32, %arg4: memref<1x8x32xf32, #tpu.memory_space<vmem>>, %arg5: memref<1x8x32xf32, #tpu.memory_space<vmem>>, %arg6: memref<1x8x32xf32, #tpu.memory_space<vmem>>, %arg7: memref<1x8x32xf32, #tpu.memory_space<vmem>>, %arg8: memref<4x8x1xf32, #tpu.memory_space<vmem>>, %arg9: memref<4x8x1xf32, #tpu.memory_space<vmem>>, %arg10: memref<4x8x8xf32, #tpu.memory_space<vmem>>) attributes {dimension_semantics = [#tpu.dimension_semantics<parallel>, #tpu.dimension_semantics<parallel>, #tpu.dimension_semantics<parallel>, #tpu.dimension_semantics<arbitrary>], iteration_bounds = array<i64: 2, 1, 1, 1>, scalar_prefetch = 0 : i64, scratch_operands = 3 : i64, tpu.core_type = #tpu.core_type<tc>, window_params = [{transform_indices = @transform_0, window_bounds = array<i64: 1, 8, 32>}, {transform_indices = @transform_1, window_bounds = array<i64: 1, 8, 32>}, {transform_indices = @transform_2, window_bounds = array<i64: 1, 8, 32>}, {transform_indices = @transform_3, window_bounds = array<i64: 1, 8, 32>}]} {
    %c0_i32 = arith.constant 0 : i32
    %0 = arith.cmpi eq, %arg3, %c0_i32 : i32
    %1 = arith.extui %0 : i1 to i32
    %c0_i32_0 = arith.constant 0 : i32
    %2 = arith.cmpi ne, %1, %c0_i32_0 : i32
    scf.if %2 {
      %cst_119 = arith.constant 0xFF800000 : f32
      %158 = vector.broadcast %cst_119 : f32 to vector<4x8x1xf32>
      %c0_120 = arith.constant 0 : index
      %c0_121 = arith.constant 0 : index
      %c0_122 = arith.constant 0 : index
      %159 = vector.load %arg8[%c0_120, %c0_121, %c0_122] : memref<4x8x1xf32, #tpu.memory_space<vmem>>, vector<4x8x1xf32>
      tpu.vector_store %arg8[%c0_120, %c0_121, %c0_122], %158 {strides = array<i32>} : memref<4x8x1xf32, #tpu.memory_space<vmem>>, vector<4x8x1xf32>,
      %cst_123 = arith.constant 0.000000e+00 : f32
      %160 = vector.broadcast %cst_123 : f32 to vector<4x8x1xf32>
      %c0_124 = arith.constant 0 : index
      %c0_125 = arith.constant 0 : index
      %c0_126 = arith.constant 0 : index
      %161 = vector.load %arg9[%c0_124, %c0_125, %c0_126] : memref<4x8x1xf32, #tpu.memory_space<vmem>>, vector<4x8x1xf32>
      tpu.vector_store %arg9[%c0_124, %c0_125, %c0_126], %160 {strides = array<i32>} : memref<4x8x1xf32, #tpu.memory_space<vmem>>, vector<4x8x1xf32>,
      %cst_127 = arith.constant 0.000000e+00 : f32
      %162 = vector.broadcast %cst_127 : f32 to vector<4x8x8xf32>
      %c0_128 = arith.constant 0 : index
      %c0_129 = arith.constant 0 : index
      %c0_130 = arith.constant 0 : index
      %163 = vector.load %arg10[%c0_128, %c0_129, %c0_130] : memref<4x8x8xf32, #tpu.memory_space<vmem>>, vector<4x8x8xf32>
      tpu.vector_store %arg10[%c0_128, %c0_129, %c0_130], %162 {strides = array<i32>} : memref<4x8x8xf32, #tpu.memory_space<vmem>>, vector<4x8x8xf32>,
    } else {
    }
    %c0 = arith.constant 0 : index
    %c0_1 = arith.constant 0 : index
    %c0_2 = arith.constant 0 : index
    %3 = vector.load %arg4[%c0, %c0_1, %c0_2] : memref<1x8x32xf32, #tpu.memory_space<vmem>>, vector<1x8x8xf32>
    %4 = vector.shape_cast %3 : vector<1x8x8xf32> to vector<8x8xf32>
    %c0_3 = arith.constant 0 : index
    %c0_4 = arith.constant 0 : index
    %c0_5 = arith.constant 0 : index
    %5 = vector.load %arg5[%c0_3, %c0_4, %c0_5] : memref<1x8x32xf32, #tpu.memory_space<vmem>>, vector<1x8x8xf32>
    %6 = vector.shape_cast %5 : vector<1x8x8xf32> to vector<8x8xf32>
    %c0_6 = arith.constant 0 : index
    %c0_7 = arith.constant 0 : index
    %c0_8 = arith.constant 0 : index
    %7 = vector.load %arg6[%c0_6, %c0_7, %c0_8] : memref<1x8x32xf32, #tpu.memory_space<vmem>>, vector<1x8x8xf32>
    %8 = vector.shape_cast %7 : vector<1x8x8xf32> to vector<8x8xf32>
    %cst = arith.constant dense<0.000000e+00> : vector<8x8xf32>
    %9 = tpu.matmul %4, %6, %cst {dimension_numbers = #tpu.dot_dimension_numbers<[1], [1], [0], [0], [0, 0, 1, 0], [], []>} : vector<8x8xf32>, vector<8x8xf32>, vector<8x8xf32> -> vector<8x8xf32>
    %c0_9 = arith.constant 0 : index
    %c0_10 = arith.constant 0 : index
    %c0_11 = arith.constant 0 : index
    %10 = vector.load %arg8[%c0_9, %c0_10, %c0_11] : memref<4x8x1xf32, #tpu.memory_space<vmem>>, vector<1x8x1xf32>
    %11 = vector.shape_cast %10 : vector<1x8x1xf32> to vector<8x1xf32>
    %cst_12 = arith.constant dense<0xFF800000> : vector<8xf32>
    %12 = vector.multi_reduction <maximumf>, %9, %cst_12 [1] : vector<8x8xf32> to vector<8xf32>
    %13 = vector.shape_cast %12 : vector<8xf32> to vector<8x1xf32>
    %14 = arith.maximumf %11, %13 : vector<8x1xf32>
    %15 = arith.subf %11, %14 : vector<8x1xf32>
    %16 = math.exp %15 : vector<8x1xf32>
    %17 = vector.broadcast %14 : vector<8x1xf32> to vector<8x8xf32>
    %18 = arith.subf %9, %17 : vector<8x8xf32>
    %19 = math.exp %18 : vector<8x8xf32>
    %c0_13 = arith.constant 0 : index
    %c0_14 = arith.constant 0 : index
    %c0_15 = arith.constant 0 : index
    %20 = vector.load %arg9[%c0_13, %c0_14, %c0_15] : memref<4x8x1xf32, #tpu.memory_space<vmem>>, vector<1x8x1xf32>
    %21 = vector.shape_cast %20 : vector<1x8x1xf32> to vector<8x1xf32>
    %22 = arith.mulf %16, %21 : vector<8x1xf32>
    %cst_16 = arith.constant dense<0.000000e+00> : vector<8xf32>
    %23 = vector.multi_reduction <add>, %19, %cst_16 [1] : vector<8x8xf32> to vector<8xf32>
    %24 = vector.shape_cast %23 : vector<8xf32> to vector<8x1xf32>
    %25 = arith.addf %22, %24 : vector<8x1xf32>
    %c0_17 = arith.constant 0 : index
    %c0_18 = arith.constant 0 : index
    %c0_19 = arith.constant 0 : index
    %26 = vector.load %arg9[%c0_17, %c0_18, %c0_19] : memref<4x8x1xf32, #tpu.memory_space<vmem>>, vector<1x8x1xf32>
    %27 = vector.shape_cast %26 : vector<1x8x1xf32> to vector<8x1xf32>
    %28 = vector.shape_cast %25 : vector<8x1xf32> to vector<1x8x1xf32>
    tpu.vector_store %arg9[%c0_17, %c0_18, %c0_19], %28 {strides = array<i32>} : memref<4x8x1xf32, #tpu.memory_space<vmem>>, vector<1x8x1xf32>,
    %c0_20 = arith.constant 0 : index
    %c0_21 = arith.constant 0 : index
    %c0_22 = arith.constant 0 : index
    %29 = vector.load %arg10[%c0_20, %c0_21, %c0_22] : memref<4x8x8xf32, #tpu.memory_space<vmem>>, vector<1x8x8xf32>
    %30 = vector.shape_cast %29 : vector<1x8x8xf32> to vector<8x8xf32>
    %31 = vector.broadcast %16 : vector<8x1xf32> to vector<8x8xf32>
    %32 = arith.mulf %31, %30 : vector<8x8xf32>
    %cst_23 = arith.constant dense<0.000000e+00> : vector<8x8xf32>
    %33 = tpu.matmul %19, %8, %cst_23 {dimension_numbers = #tpu.dot_dimension_numbers<[1], [0], [0], [1], [0, 0, 1, 1], [], []>} : vector<8x8xf32>, vector<8x8xf32>, vector<8x8xf32> -> vector<8x8xf32>
    %34 = arith.addf %32, %33 : vector<8x8xf32>
    %c0_24 = arith.constant 0 : index
    %c0_25 = arith.constant 0 : index
    %c0_26 = arith.constant 0 : index
    %35 = vector.load %arg10[%c0_24, %c0_25, %c0_26] : memref<4x8x8xf32, #tpu.memory_space<vmem>>, vector<1x8x8xf32>
    %36 = vector.shape_cast %35 : vector<1x8x8xf32> to vector<8x8xf32>
    %37 = vector.shape_cast %34 : vector<8x8xf32> to vector<1x8x8xf32>
    tpu.vector_store %arg10[%c0_24, %c0_25, %c0_26], %37 {strides = array<i32>} : memref<4x8x8xf32, #tpu.memory_space<vmem>>, vector<1x8x8xf32>,
    %c0_27 = arith.constant 0 : index
    %c0_28 = arith.constant 0 : index
    %c0_29 = arith.constant 0 : index
    %38 = vector.load %arg8[%c0_27, %c0_28, %c0_29] : memref<4x8x1xf32, #tpu.memory_space<vmem>>, vector<1x8x1xf32>
    %39 = vector.shape_cast %38 : vector<1x8x1xf32> to vector<8x1xf32>
    %40 = vector.shape_cast %14 : vector<8x1xf32> to vector<1x8x1xf32>
    tpu.vector_store %arg8[%c0_27, %c0_28, %c0_29], %40 {strides = array<i32>} : memref<4x8x1xf32, #tpu.memory_space<vmem>>, vector<1x8x1xf32>,
    %c0_30 = arith.constant 0 : index
    %c0_31 = arith.constant 0 : index
    %c8 = arith.constant 8 : index
    %41 = vector.load %arg4[%c0_30, %c0_31, %c8] : memref<1x8x32xf32, #tpu.memory_space<vmem>>, vector<1x8x8xf32>
    %42 = vector.shape_cast %41 : vector<1x8x8xf32> to vector<8x8xf32>
    %c0_32 = arith.constant 0 : index
    %c0_33 = arith.constant 0 : index
    %c8_34 = arith.constant 8 : index
    %43 = vector.load %arg5[%c0_32, %c0_33, %c8_34] : memref<1x8x32xf32, #tpu.memory_space<vmem>>, vector<1x8x8xf32>
    %44 = vector.shape_cast %43 : vector<1x8x8xf32> to vector<8x8xf32>
    %c0_35 = arith.constant 0 : index
    %c0_36 = arith.constant 0 : index
    %c8_37 = arith.constant 8 : index
    %45 = vector.load %arg6[%c0_35, %c0_36, %c8_37] : memref<1x8x32xf32, #tpu.memory_space<vmem>>, vector<1x8x8xf32>
    %46 = vector.shape_cast %45 : vector<1x8x8xf32> to vector<8x8xf32>
    %cst_38 = arith.constant dense<0.000000e+00> : vector<8x8xf32>
    %47 = tpu.matmul %42, %44, %cst_38 {dimension_numbers = #tpu.dot_dimension_numbers<[1], [1], [0], [0], [0, 0, 1, 0], [], []>} : vector<8x8xf32>, vector<8x8xf32>, vector<8x8xf32> -> vector<8x8xf32>
    %c1 = arith.constant 1 : index
    %c0_39 = arith.constant 0 : index
    %c0_40 = arith.constant 0 : index
    %48 = vector.load %arg8[%c1, %c0_39, %c0_40] : memref<4x8x1xf32, #tpu.memory_space<vmem>>, vector<1x8x1xf32>
    %49 = vector.shape_cast %48 : vector<1x8x1xf32> to vector<8x1xf32>
    %cst_41 = arith.constant dense<0xFF800000> : vector<8xf32>
    %50 = vector.multi_reduction <maximumf>, %47, %cst_41 [1] : vector<8x8xf32> to vector<8xf32>
    %51 = vector.shape_cast %50 : vector<8xf32> to vector<8x1xf32>
    %52 = arith.maximumf %49, %51 : vector<8x1xf32>
    %53 = arith.subf %49, %52 : vector<8x1xf32>
    %54 = math.exp %53 : vector<8x1xf32>
    %55 = vector.broadcast %52 : vector<8x1xf32> to vector<8x8xf32>
    %56 = arith.subf %47, %55 : vector<8x8xf32>
    %57 = math.exp %56 : vector<8x8xf32>
    %c1_42 = arith.constant 1 : index
    %c0_43 = arith.constant 0 : index
    %c0_44 = arith.constant 0 : index
    %58 = vector.load %arg9[%c1_42, %c0_43, %c0_44] : memref<4x8x1xf32, #tpu.memory_space<vmem>>, vector<1x8x1xf32>
    %59 = vector.shape_cast %58 : vector<1x8x1xf32> to vector<8x1xf32>
    %60 = arith.mulf %54, %59 : vector<8x1xf32>
    %cst_45 = arith.constant dense<0.000000e+00> : vector<8xf32>
    %61 = vector.multi_reduction <add>, %57, %cst_45 [1] : vector<8x8xf32> to vector<8xf32>
    %62 = vector.shape_cast %61 : vector<8xf32> to vector<8x1xf32>
    %63 = arith.addf %60, %62 : vector<8x1xf32>
    %c1_46 = arith.constant 1 : index
    %c0_47 = arith.constant 0 : index
    %c0_48 = arith.constant 0 : index
    %64 = vector.load %arg9[%c1_46, %c0_47, %c0_48] : memref<4x8x1xf32, #tpu.memory_space<vmem>>, vector<1x8x1xf32>
    %65 = vector.shape_cast %64 : vector<1x8x1xf32> to vector<8x1xf32>
    %66 = vector.shape_cast %63 : vector<8x1xf32> to vector<1x8x1xf32>
    tpu.vector_store %arg9[%c1_46, %c0_47, %c0_48], %66 {strides = array<i32>} : memref<4x8x1xf32, #tpu.memory_space<vmem>>, vector<1x8x1xf32>,
    %c1_49 = arith.constant 1 : index
    %c0_50 = arith.constant 0 : index
    %c0_51 = arith.constant 0 : index
    %67 = vector.load %arg10[%c1_49, %c0_50, %c0_51] : memref<4x8x8xf32, #tpu.memory_space<vmem>>, vector<1x8x8xf32>
    %68 = vector.shape_cast %67 : vector<1x8x8xf32> to vector<8x8xf32>
    %69 = vector.broadcast %54 : vector<8x1xf32> to vector<8x8xf32>
    %70 = arith.mulf %69, %68 : vector<8x8xf32>
    %cst_52 = arith.constant dense<0.000000e+00> : vector<8x8xf32>
    %71 = tpu.matmul %57, %46, %cst_52 {dimension_numbers = #tpu.dot_dimension_numbers<[1], [0], [0], [1], [0, 0, 1, 1], [], []>} : vector<8x8xf32>, vector<8x8xf32>, vector<8x8xf32> -> vector<8x8xf32>
    %72 = arith.addf %70, %71 : vector<8x8xf32>
    %c1_53 = arith.constant 1 : index
    %c0_54 = arith.constant 0 : index
    %c0_55 = arith.constant 0 : index
    %73 = vector.load %arg10[%c1_53, %c0_54, %c0_55] : memref<4x8x8xf32, #tpu.memory_space<vmem>>, vector<1x8x8xf32>
    %74 = vector.shape_cast %73 : vector<1x8x8xf32> to vector<8x8xf32>
    %75 = vector.shape_cast %72 : vector<8x8xf32> to vector<1x8x8xf32>
    tpu.vector_store %arg10[%c1_53, %c0_54, %c0_55], %75 {strides = array<i32>} : memref<4x8x8xf32, #tpu.memory_space<vmem>>, vector<1x8x8xf32>,
    %c1_56 = arith.constant 1 : index
    %c0_57 = arith.constant 0 : index
    %c0_58 = arith.constant 0 : index
    %76 = vector.load %arg8[%c1_56, %c0_57, %c0_58] : memref<4x8x1xf32, #tpu.memory_space<vmem>>, vector<1x8x1xf32>
    %77 = vector.shape_cast %76 : vector<1x8x1xf32> to vector<8x1xf32>
    %78 = vector.shape_cast %52 : vector<8x1xf32> to vector<1x8x1xf32>
    tpu.vector_store %arg8[%c1_56, %c0_57, %c0_58], %78 {strides = array<i32>} : memref<4x8x1xf32, #tpu.memory_space<vmem>>, vector<1x8x1xf32>,
    %c0_59 = arith.constant 0 : index
    %c0_60 = arith.constant 0 : index
    %c16 = arith.constant 16 : index
    %79 = vector.load %arg4[%c0_59, %c0_60, %c16] : memref<1x8x32xf32, #tpu.memory_space<vmem>>, vector<1x8x8xf32>
    %80 = vector.shape_cast %79 : vector<1x8x8xf32> to vector<8x8xf32>
    %c0_61 = arith.constant 0 : index
    %c0_62 = arith.constant 0 : index
    %c16_63 = arith.constant 16 : index
    %81 = vector.load %arg5[%c0_61, %c0_62, %c16_63] : memref<1x8x32xf32, #tpu.memory_space<vmem>>, vector<1x8x8xf32>
    %82 = vector.shape_cast %81 : vector<1x8x8xf32> to vector<8x8xf32>
    %c0_64 = arith.constant 0 : index
    %c0_65 = arith.constant 0 : index
    %c16_66 = arith.constant 16 : index
    %83 = vector.load %arg6[%c0_64, %c0_65, %c16_66] : memref<1x8x32xf32, #tpu.memory_space<vmem>>, vector<1x8x8xf32>
    %84 = vector.shape_cast %83 : vector<1x8x8xf32> to vector<8x8xf32>
    %cst_67 = arith.constant dense<0.000000e+00> : vector<8x8xf32>
    %85 = tpu.matmul %80, %82, %cst_67 {dimension_numbers = #tpu.dot_dimension_numbers<[1], [1], [0], [0], [0, 0, 1, 0], [], []>} : vector<8x8xf32>, vector<8x8xf32>, vector<8x8xf32> -> vector<8x8xf32>
    %c2 = arith.constant 2 : index
    %c0_68 = arith.constant 0 : index
    %c0_69 = arith.constant 0 : index
    %86 = vector.load %arg8[%c2, %c0_68, %c0_69] : memref<4x8x1xf32, #tpu.memory_space<vmem>>, vector<1x8x1xf32>
    %87 = vector.shape_cast %86 : vector<1x8x1xf32> to vector<8x1xf32>
    %cst_70 = arith.constant dense<0xFF800000> : vector<8xf32>
    %88 = vector.multi_reduction <maximumf>, %85, %cst_70 [1] : vector<8x8xf32> to vector<8xf32>
    %89 = vector.shape_cast %88 : vector<8xf32> to vector<8x1xf32>
    %90 = arith.maximumf %87, %89 : vector<8x1xf32>
    %91 = arith.subf %87, %90 : vector<8x1xf32>
    %92 = math.exp %91 : vector<8x1xf32>
    %93 = vector.broadcast %90 : vector<8x1xf32> to vector<8x8xf32>
    %94 = arith.subf %85, %93 : vector<8x8xf32>
    %95 = math.exp %94 : vector<8x8xf32>
    %c2_71 = arith.constant 2 : index
    %c0_72 = arith.constant 0 : index
    %c0_73 = arith.constant 0 : index
    %96 = vector.load %arg9[%c2_71, %c0_72, %c0_73] : memref<4x8x1xf32, #tpu.memory_space<vmem>>, vector<1x8x1xf32>
    %97 = vector.shape_cast %96 : vector<1x8x1xf32> to vector<8x1xf32>
    %98 = arith.mulf %92, %97 : vector<8x1xf32>
    %cst_74 = arith.constant dense<0.000000e+00> : vector<8xf32>
    %99 = vector.multi_reduction <add>, %95, %cst_74 [1] : vector<8x8xf32> to vector<8xf32>
    %100 = vector.shape_cast %99 : vector<8xf32> to vector<8x1xf32>
    %101 = arith.addf %98, %100 : vector<8x1xf32>
    %c2_75 = arith.constant 2 : index
    %c0_76 = arith.constant 0 : index
    %c0_77 = arith.constant 0 : index
    %102 = vector.load %arg9[%c2_75, %c0_76, %c0_77] : memref<4x8x1xf32, #tpu.memory_space<vmem>>, vector<1x8x1xf32>
    %103 = vector.shape_cast %102 : vector<1x8x1xf32> to vector<8x1xf32>
    %104 = vector.shape_cast %101 : vector<8x1xf32> to vector<1x8x1xf32>
    tpu.vector_store %arg9[%c2_75, %c0_76, %c0_77], %104 {strides = array<i32>} : memref<4x8x1xf32, #tpu.memory_space<vmem>>, vector<1x8x1xf32>,
    %c2_78 = arith.constant 2 : index
    %c0_79 = arith.constant 0 : index
    %c0_80 = arith.constant 0 : index
    %105 = vector.load %arg10[%c2_78, %c0_79, %c0_80] : memref<4x8x8xf32, #tpu.memory_space<vmem>>, vector<1x8x8xf32>
    %106 = vector.shape_cast %105 : vector<1x8x8xf32> to vector<8x8xf32>
    %107 = vector.broadcast %92 : vector<8x1xf32> to vector<8x8xf32>
    %108 = arith.mulf %107, %106 : vector<8x8xf32>
    %cst_81 = arith.constant dense<0.000000e+00> : vector<8x8xf32>
    %109 = tpu.matmul %95, %84, %cst_81 {dimension_numbers = #tpu.dot_dimension_numbers<[1], [0], [0], [1], [0, 0, 1, 1], [], []>} : vector<8x8xf32>, vector<8x8xf32>, vector<8x8xf32> -> vector<8x8xf32>
    %110 = arith.addf %108, %109 : vector<8x8xf32>
    %c2_82 = arith.constant 2 : index
    %c0_83 = arith.constant 0 : index
    %c0_84 = arith.constant 0 : index
    %111 = vector.load %arg10[%c2_82, %c0_83, %c0_84] : memref<4x8x8xf32, #tpu.memory_space<vmem>>, vector<1x8x8xf32>
    %112 = vector.shape_cast %111 : vector<1x8x8xf32> to vector<8x8xf32>
    %113 = vector.shape_cast %110 : vector<8x8xf32> to vector<1x8x8xf32>
    tpu.vector_store %arg10[%c2_82, %c0_83, %c0_84], %113 {strides = array<i32>} : memref<4x8x8xf32, #tpu.memory_space<vmem>>, vector<1x8x8xf32>,
    %c2_85 = arith.constant 2 : index
    %c0_86 = arith.constant 0 : index
    %c0_87 = arith.constant 0 : index
    %114 = vector.load %arg8[%c2_85, %c0_86, %c0_87] : memref<4x8x1xf32, #tpu.memory_space<vmem>>, vector<1x8x1xf32>
    %115 = vector.shape_cast %114 : vector<1x8x1xf32> to vector<8x1xf32>
    %116 = vector.shape_cast %90 : vector<8x1xf32> to vector<1x8x1xf32>
    tpu.vector_store %arg8[%c2_85, %c0_86, %c0_87], %116 {strides = array<i32>} : memref<4x8x1xf32, #tpu.memory_space<vmem>>, vector<1x8x1xf32>,
    %c0_88 = arith.constant 0 : index
    %c0_89 = arith.constant 0 : index
    %c24 = arith.constant 24 : index
    %117 = vector.load %arg4[%c0_88, %c0_89, %c24] : memref<1x8x32xf32, #tpu.memory_space<vmem>>, vector<1x8x8xf32>
    %118 = vector.shape_cast %117 : vector<1x8x8xf32> to vector<8x8xf32>
    %c0_90 = arith.constant 0 : index
    %c0_91 = arith.constant 0 : index
    %c24_92 = arith.constant 24 : index
    %119 = vector.load %arg5[%c0_90, %c0_91, %c24_92] : memref<1x8x32xf32, #tpu.memory_space<vmem>>, vector<1x8x8xf32>
    %120 = vector.shape_cast %119 : vector<1x8x8xf32> to vector<8x8xf32>
    %c0_93 = arith.constant 0 : index
    %c0_94 = arith.constant 0 : index
    %c24_95 = arith.constant 24 : index
    %121 = vector.load %arg6[%c0_93, %c0_94, %c24_95] : memref<1x8x32xf32, #tpu.memory_space<vmem>>, vector<1x8x8xf32>
    %122 = vector.shape_cast %121 : vector<1x8x8xf32> to vector<8x8xf32>
    %cst_96 = arith.constant dense<0.000000e+00> : vector<8x8xf32>
    %123 = tpu.matmul %118, %120, %cst_96 {dimension_numbers = #tpu.dot_dimension_numbers<[1], [1], [0], [0], [0, 0, 1, 0], [], []>} : vector<8x8xf32>, vector<8x8xf32>, vector<8x8xf32> -> vector<8x8xf32>
    %c3 = arith.constant 3 : index
    %c0_97 = arith.constant 0 : index
    %c0_98 = arith.constant 0 : index
    %124 = vector.load %arg8[%c3, %c0_97, %c0_98] : memref<4x8x1xf32, #tpu.memory_space<vmem>>, vector<1x8x1xf32>
    %125 = vector.shape_cast %124 : vector<1x8x1xf32> to vector<8x1xf32>
    %cst_99 = arith.constant dense<0xFF800000> : vector<8xf32>
    %126 = vector.multi_reduction <maximumf>, %123, %cst_99 [1] : vector<8x8xf32> to vector<8xf32>
    %127 = vector.shape_cast %126 : vector<8xf32> to vector<8x1xf32>
    %128 = arith.maximumf %125, %127 : vector<8x1xf32>
    %129 = arith.subf %125, %128 : vector<8x1xf32>
    %130 = math.exp %129 : vector<8x1xf32>
    %131 = vector.broadcast %128 : vector<8x1xf32> to vector<8x8xf32>
    %132 = arith.subf %123, %131 : vector<8x8xf32>
    %133 = math.exp %132 : vector<8x8xf32>
    %c3_100 = arith.constant 3 : index
    %c0_101 = arith.constant 0 : index
    %c0_102 = arith.constant 0 : index
    %134 = vector.load %arg9[%c3_100, %c0_101, %c0_102] : memref<4x8x1xf32, #tpu.memory_space<vmem>>, vector<1x8x1xf32>
    %135 = vector.shape_cast %134 : vector<1x8x1xf32> to vector<8x1xf32>
    %136 = arith.mulf %130, %135 : vector<8x1xf32>
    %cst_103 = arith.constant dense<0.000000e+00> : vector<8xf32>
    %137 = vector.multi_reduction <add>, %133, %cst_103 [1] : vector<8x8xf32> to vector<8xf32>
    %138 = vector.shape_cast %137 : vector<8xf32> to vector<8x1xf32>
    %139 = arith.addf %136, %138 : vector<8x1xf32>
    %c3_104 = arith.constant 3 : index
    %c0_105 = arith.constant 0 : index
    %c0_106 = arith.constant 0 : index
    %140 = vector.load %arg9[%c3_104, %c0_105, %c0_106] : memref<4x8x1xf32, #tpu.memory_space<vmem>>, vector<1x8x1xf32>
    %141 = vector.shape_cast %140 : vector<1x8x1xf32> to vector<8x1xf32>
    %142 = vector.shape_cast %139 : vector<8x1xf32> to vector<1x8x1xf32>
    tpu.vector_store %arg9[%c3_104, %c0_105, %c0_106], %142 {strides = array<i32>} : memref<4x8x1xf32, #tpu.memory_space<vmem>>, vector<1x8x1xf32>,
    %c3_107 = arith.constant 3 : index
    %c0_108 = arith.constant 0 : index
    %c0_109 = arith.constant 0 : index
    %143 = vector.load %arg10[%c3_107, %c0_108, %c0_109] : memref<4x8x8xf32, #tpu.memory_space<vmem>>, vector<1x8x8xf32>
    %144 = vector.shape_cast %143 : vector<1x8x8xf32> to vector<8x8xf32>
    %145 = vector.broadcast %130 : vector<8x1xf32> to vector<8x8xf32>
    %146 = arith.mulf %145, %144 : vector<8x8xf32>
    %cst_110 = arith.constant dense<0.000000e+00> : vector<8x8xf32>
    %147 = tpu.matmul %133, %122, %cst_110 {dimension_numbers = #tpu.dot_dimension_numbers<[1], [0], [0], [1], [0, 0, 1, 1], [], []>} : vector<8x8xf32>, vector<8x8xf32>, vector<8x8xf32> -> vector<8x8xf32>
    %148 = arith.addf %146, %147 : vector<8x8xf32>
    %c3_111 = arith.constant 3 : index
    %c0_112 = arith.constant 0 : index
    %c0_113 = arith.constant 0 : index
    %149 = vector.load %arg10[%c3_111, %c0_112, %c0_113] : memref<4x8x8xf32, #tpu.memory_space<vmem>>, vector<1x8x8xf32>
    %150 = vector.shape_cast %149 : vector<1x8x8xf32> to vector<8x8xf32>
    %151 = vector.shape_cast %148 : vector<8x8xf32> to vector<1x8x8xf32>
    tpu.vector_store %arg10[%c3_111, %c0_112, %c0_113], %151 {strides = array<i32>} : memref<4x8x8xf32, #tpu.memory_space<vmem>>, vector<1x8x8xf32>,
    %c3_114 = arith.constant 3 : index
    %c0_115 = arith.constant 0 : index
    %c0_116 = arith.constant 0 : index
    %152 = vector.load %arg8[%c3_114, %c0_115, %c0_116] : memref<4x8x1xf32, #tpu.memory_space<vmem>>, vector<1x8x1xf32>
    %153 = vector.shape_cast %152 : vector<1x8x1xf32> to vector<8x1xf32>
    %154 = vector.shape_cast %128 : vector<8x1xf32> to vector<1x8x1xf32>
    tpu.vector_store %arg8[%c3_114, %c0_115, %c0_116], %154 {strides = array<i32>} : memref<4x8x1xf32, #tpu.memory_space<vmem>>, vector<1x8x1xf32>,
    %c0_i32_117 = arith.constant 0 : i32
    %155 = arith.cmpi eq, %arg3, %c0_i32_117 : i32
    %156 = arith.extui %155 : i1 to i32
    %c0_i32_118 = arith.constant 0 : i32
    %157 = arith.cmpi ne, %156, %c0_i32_118 : i32
    scf.if %157 {
      %c0_119 = arith.constant 0 : index
      %c0_120 = arith.constant 0 : index
      %c0_121 = arith.constant 0 : index
      %158 = vector.load %arg9[%c0_119, %c0_120, %c0_121] : memref<4x8x1xf32, #tpu.memory_space<vmem>>, vector<1x8x1xf32>
      %159 = vector.shape_cast %158 : vector<1x8x1xf32> to vector<8x1xf32>
      %160 = tpu.reciprocal %159 {approx = true} : vector<8x1xf32> -> vector<8x1xf32>
      %c0_122 = arith.constant 0 : index
      %c0_123 = arith.constant 0 : index
      %c0_124 = arith.constant 0 : index
      %161 = vector.load %arg10[%c0_122, %c0_123, %c0_124] : memref<4x8x8xf32, #tpu.memory_space<vmem>>, vector<1x8x8xf32>
      %162 = vector.shape_cast %161 : vector<1x8x8xf32> to vector<8x8xf32>
      %163 = vector.broadcast %160 : vector<8x1xf32> to vector<8x8xf32>
      %164 = arith.mulf %162, %163 : vector<8x8xf32>
      %c0_125 = arith.constant 0 : index
      %c0_126 = arith.constant 0 : index
      %c0_127 = arith.constant 0 : index
      %165 = vector.load %arg7[%c0_125, %c0_126, %c0_127] : memref<1x8x32xf32, #tpu.memory_space<vmem>>, vector<1x8x8xf32>
      %166 = vector.shape_cast %165 : vector<1x8x8xf32> to vector<8x8xf32>
      %167 = vector.shape_cast %164 : vector<8x8xf32> to vector<1x8x8xf32>
      tpu.vector_store %arg7[%c0_125, %c0_126, %c0_127], %167 {strides = array<i32>} : memref<1x8x32xf32, #tpu.memory_space<vmem>>, vector<1x8x8xf32>,
      %c1_128 = arith.constant 1 : index
      %c0_129 = arith.constant 0 : index
      %c0_130 = arith.constant 0 : index
      %168 = vector.load %arg9[%c1_128, %c0_129, %c0_130] : memref<4x8x1xf32, #tpu.memory_space<vmem>>, vector<1x8x1xf32>
      %169 = vector.shape_cast %168 : vector<1x8x1xf32> to vector<8x1xf32>
      %170 = tpu.reciprocal %169 {approx = true} : vector<8x1xf32> -> vector<8x1xf32>
      %c1_131 = arith.constant 1 : index
      %c0_132 = arith.constant 0 : index
      %c0_133 = arith.constant 0 : index
      %171 = vector.load %arg10[%c1_131, %c0_132, %c0_133] : memref<4x8x8xf32, #tpu.memory_space<vmem>>, vector<1x8x8xf32>
      %172 = vector.shape_cast %171 : vector<1x8x8xf32> to vector<8x8xf32>
      %173 = vector.broadcast %170 : vector<8x1xf32> to vector<8x8xf32>
      %174 = arith.mulf %172, %173 : vector<8x8xf32>
      %c0_134 = arith.constant 0 : index
      %c0_135 = arith.constant 0 : index
      %c8_136 = arith.constant 8 : index
      %175 = vector.load %arg7[%c0_134, %c0_135, %c8_136] : memref<1x8x32xf32, #tpu.memory_space<vmem>>, vector<1x8x8xf32>
      %176 = vector.shape_cast %175 : vector<1x8x8xf32> to vector<8x8xf32>
      %177 = vector.shape_cast %174 : vector<8x8xf32> to vector<1x8x8xf32>
      tpu.vector_store %arg7[%c0_134, %c0_135, %c8_136], %177 {strides = array<i32>} : memref<1x8x32xf32, #tpu.memory_space<vmem>>, vector<1x8x8xf32>,
      %c2_137 = arith.constant 2 : index
      %c0_138 = arith.constant 0 : index
      %c0_139 = arith.constant 0 : index
      %178 = vector.load %arg9[%c2_137, %c0_138, %c0_139] : memref<4x8x1xf32, #tpu.memory_space<vmem>>, vector<1x8x1xf32>
      %179 = vector.shape_cast %178 : vector<1x8x1xf32> to vector<8x1xf32>
      %180 = tpu.reciprocal %179 {approx = true} : vector<8x1xf32> -> vector<8x1xf32>
      %c2_140 = arith.constant 2 : index
      %c0_141 = arith.constant 0 : index
      %c0_142 = arith.constant 0 : index
      %181 = vector.load %arg10[%c2_140, %c0_141, %c0_142] : memref<4x8x8xf32, #tpu.memory_space<vmem>>, vector<1x8x8xf32>
      %182 = vector.shape_cast %181 : vector<1x8x8xf32> to vector<8x8xf32>
      %183 = vector.broadcast %180 : vector<8x1xf32> to vector<8x8xf32>
      %184 = arith.mulf %182, %183 : vector<8x8xf32>
      %c0_143 = arith.constant 0 : index
      %c0_144 = arith.constant 0 : index
      %c16_145 = arith.constant 16 : index
      %185 = vector.load %arg7[%c0_143, %c0_144, %c16_145] : memref<1x8x32xf32, #tpu.memory_space<vmem>>, vector<1x8x8xf32>
      %186 = vector.shape_cast %185 : vector<1x8x8xf32> to vector<8x8xf32>
      %187 = vector.shape_cast %184 : vector<8x8xf32> to vector<1x8x8xf32>
      tpu.vector_store %arg7[%c0_143, %c0_144, %c16_145], %187 {strides = array<i32>} : memref<1x8x32xf32, #tpu.memory_space<vmem>>, vector<1x8x8xf32>,
      %c3_146 = arith.constant 3 : index
      %c0_147 = arith.constant 0 : index
      %c0_148 = arith.constant 0 : index
      %188 = vector.load %arg9[%c3_146, %c0_147, %c0_148] : memref<4x8x1xf32, #tpu.memory_space<vmem>>, vector<1x8x1xf32>
      %189 = vector.shape_cast %188 : vector<1x8x1xf32> to vector<8x1xf32>
      %190 = tpu.reciprocal %189 {approx = true} : vector<8x1xf32> -> vector<8x1xf32>
      %c3_149 = arith.constant 3 : index
      %c0_150 = arith.constant 0 : index
      %c0_151 = arith.constant 0 : index
      %191 = vector.load %arg10[%c3_149, %c0_150, %c0_151] : memref<4x8x8xf32, #tpu.memory_space<vmem>>, vector<1x8x8xf32>
      %192 = vector.shape_cast %191 : vector<1x8x8xf32> to vector<8x8xf32>
      %193 = vector.broadcast %190 : vector<8x1xf32> to vector<8x8xf32>
      %194 = arith.mulf %192, %193 : vector<8x8xf32>
      %c0_152 = arith.constant 0 : index
      %c0_153 = arith.constant 0 : index
      %c24_154 = arith.constant 24 : index
      %195 = vector.load %arg7[%c0_152, %c0_153, %c24_154] : memref<1x8x32xf32, #tpu.memory_space<vmem>>, vector<1x8x8xf32>
      %196 = vector.shape_cast %195 : vector<1x8x8xf32> to vector<8x8xf32>
      %197 = vector.shape_cast %194 : vector<8x8xf32> to vector<1x8x8xf32>
      tpu.vector_store %arg7[%c0_152, %c0_153, %c24_154], %197 {strides = array<i32>} : memref<1x8x32xf32, #tpu.memory_space<vmem>>, vector<1x8x8xf32>,
    } else {
    }
    return
  }
  func.func @transform_0(%arg0: i32, %arg1: i32, %arg2: i32, %arg3: i32) -> (i32, i32, i32) {
    %c0_i32 = arith.constant 0 : i32
    return %arg0, %arg2, %arg1 : i32, i32, i32
  }
  func.func @transform_1(%arg0: i32, %arg1: i32, %arg2: i32, %arg3: i32) -> (i32, i32, i32) {
    %c0_i32 = arith.constant 0 : i32
    return %arg0, %arg3, %arg1 : i32, i32, i32
  }
  func.func @transform_2(%arg0: i32, %arg1: i32, %arg2: i32, %arg3: i32) -> (i32, i32, i32) {
    %c0_i32 = arith.constant 0 : i32
    return %arg0, %arg3, %arg1 : i32, i32, i32
  }
  func.func @transform_3(%arg0: i32, %arg1: i32, %arg2: i32, %arg3: i32) -> (i32, i32, i32) {
    %c0_i32 = arith.constant 0 : i32
    return %arg0, %arg2, %arg1 : i32, i32, i32
  }
}

</mosaic_0001>

<llo_original>
// kernel: multi_head_attention.5
$region0: #{multi_head_attention.5}
  #allocation0 [shape = 'u32[]', space=smem, size = 0x4, offset = 0x4, fixed_abs, tag = 'smem constant byte address 0x4 - core index']
  #allocation1 [shape = 'u32[144,128]{1,0:T(1,128)}', space=vmem, size = 0x12000, scoped, tag = 'internal scratch']
  #allocation2 [shape = 'f32[16,32]{1,0:T(8,128)}', space=vmem, size = 0x2000, scoped, tag = 'scratch operand']
  %s0 = inlined_call_operand.vmem [shape: f32[16,32], index: 0, kind: input, shape index: {}]
  %s1 = inlined_call_operand.vmem [shape: f32[32,32], index: 1, kind: input, shape index: {}]
  %s2 = inlined_call_operand.vmem [shape: f32[1,32], index: 2, kind: input, shape index: {}]
  %s3 = inlined_call_operand.hbm [shape: f32[16,32], index: 3, kind: output, shape index: {}]
  %s4 = sld [smem:[#allocation0]]
  $region30: #{multi_head_attention.5} parent=0
    _
  %s6 = ssub.s32 1, %s4
  %s7 = scalar_select 0, %s6, %s4
  $region1: #{multi_head_attention.5} parent=0
    #allocation3 [shape = 'u8[8192]{0}', space=vmem, size = 0x2000, scoped, tag = 'output window, operand 0, single buffered']
    #allocation4 [shape = 's32[1]{0}', space=sflag, size = 0x4, scoped, tag = 'scoped memory for multi_head_attention.5']
    %8 = vsyncpa [#allocation4], 0
    // Predicated region
    $region2: #{multi_head_attention.5} parent=1 // pred_check
      _
    $region3: #{multi_head_attention.5} parent=1 // pred_check_branch
      %10 = sbr.rel (0) target = $region5
    $region4: #{multi_head_attention.5} parent=1 // pred_region
      _
    $region5: #{multi_head_attention.5} parent=1 // pred_fallthru
      _
    // Predicated region
    $region6: #{multi_head_attention.5} parent=1 // pred_check
      _
    $region7: #{multi_head_attention.5} parent=1 // pred_check_branch
      %12 = sbr.rel (0) target = $region9
    $region8: #{multi_head_attention.5} parent=1 // pred_region
      _
    $region9: #{multi_head_attention.5} parent=1 // pred_fallthru
      _
    // Predicated region
    $region10: #{multi_head_attention.5} parent=1 // pred_check
      _
    $region11: #{multi_head_attention.5} parent=1 // pred_check_branch
      %14 = sbr.rel (0) target = $region13
    $region12: #{multi_head_attention.5} parent=1 // pred_region
      _
    $region13: #{multi_head_attention.5} parent=1 // pred_fallthru
      _
    %p15 = scmp.eq.s32.totalorder 0, 0
    // Predicated region
    $region14: #{multi_head_attention.5} parent=1 // pred_check
      %p16 = pneg %p15
    $region15: #{multi_head_attention.5} parent=1 // pred_check_branch
      %18 = sbr.rel (%p16) target = $region17
    $region16: #{multi_head_attention.5} parent=1 // pred_region
      %vm19 = vcmask 261120
      %20 = vst.msk [vmem:[#allocation2] sm:$0xff] %vm19, 0.0
      %21 = vst.msk [vmem:[#allocation2 + $0x8] sm:$0xff] %vm19, 0.0
    $region17: #{multi_head_attention.5} parent=1 // pred_fallthru
      _
    %v22 = vld [vmem:[#allocation2] sm:$0xff]
    %v23 = vld [vmem:[#allocation2 + $0x8] sm:$0xff]
    %v24 = vld [vmem:[%s0] sm:$0xff]
    %v25 = vld [vmem:[%s0 + $0x8] sm:$0xff]
    %v26 = vld [vmem:[%s1] sm:$0xff]
    %v27 = vld [vmem:[%s1 + $0x8] sm:$0xff]
    %v28 = vld [vmem:[%s1 + $0x10] sm:$0xff]
    %v29 = vld [vmem:[%s1 + $0x18] sm:$0xff]
    %vm30 = vcmask 261120
    %v32 = vsel %vm30, %v24, 0
    %v35 = vsel %vm30, %v25, 0
    %37 = vmatprep.subr.mxu0 0.0
    %38 = vmatpush1.msra.mxu0 %v26
    %39 = vmatprep.subr.mxu0 0.0
    %40 = vmatpush1.msra.mxu0 %v27
    %41 = vmatprep.subr.mxu0 0.0
    %42 = vmatpush1.msra.mxu0 %v28
    %43 = vmatprep.subr.mxu0 0.0
    %44 = vmatpush1.msra.mxu0 %v29
    %45 = vmatprep.subr.mxu0 0.0
    %46 = vmatpush1.msra.mxu0 0.0
    %47 = vmatprep.subr.mxu0 0.0
    %48 = vmatpush1.msra.mxu0 0.0
    %49 = vmatprep.subr.mxu0 0.0
    %50 = vmatpush1.msra.mxu0 0.0
    %51 = vmatprep.subr.mxu0 0.0
    %52 = vmatpush1.msra.mxu0 0.0
    %53 = vmatprep.subr.mxu0 0.0
    %54 = vmatpush1.msra.mxu0 0.0
    %55 = vmatprep.subr.mxu0 0.0
    %56 = vmatpush1.msra.mxu0 0.0
    %57 = vmatprep.subr.mxu0 0.0
    %58 = vmatpush1.msra.mxu0 0.0
    %59 = vmatprep.subr.mxu0 0.0
    %60 = vmatpush1.msra.mxu0 0.0
    %61 = vmatprep.subr.mxu0 0.0
    %62 = vmatpush1.msra.mxu0 0.0
    %63 = vmatprep.subr.mxu0 0.0
    %64 = vmatpush1.msra.mxu0 0.0
    %65 = vmatprep.subr.mxu0 0.0
    %66 = vmatpush1.msra.mxu0 0.0
    %67 = vmatprep.subr.mxu0 0.0
    %68 = vmatpush1.msra.mxu0 0.0
    %69 = vmatprep.subr.mxu0 0.0
    %70 = vmatpush1.msra.mxu0 0.0
    %71 = vmatprep.subr.mxu0 0.0
    %72 = vmatpush1.msra.mxu0 0.0
    %73 = vmatprep.subr.mxu0 0.0
    %74 = vmatpush1.msra.mxu0 0.0
    %75 = vmatprep.subr.mxu0 0.0
    %76 = vmatpush1.msra.mxu0 0.0
    %77 = vmatprep.subr.mxu0 0.0
    %78 = vmatpush1.msra.mxu0 0.0
    %79 = vmatprep.subr.mxu0 0.0
    %80 = vmatpush1.msra.mxu0 0.0
    %81 = vmatprep.subr.mxu0 0.0
    %82 = vmatpush1.msra.mxu0 0.0
    %83 = vmatprep.subr.mxu0 0.0
    %84 = vmatpush1.msra.mxu0 0.0
    %85 = vmatprep.subr.mxu0 0.0
    %86 = vmatpush1.msra.mxu0 0.0
    %87 = vmatprep.subr.mxu0 0.0
    %88 = vmatpush1.msra.mxu0 0.0
    %89 = vmatprep.subr.mxu0 0.0
    %90 = vmatpush1.msra.mxu0 0.0
    %91 = vmatprep.subr.mxu0 0.0
    %92 = vmatpush1.msra.mxu0 0.0
    %93 = vmatprep.subr.mxu0 0.0
    %94 = vmatpush1.msra.mxu0 0.0
    %95 = vmatprep.subr.mxu0 0.0
    %96 = vmatpush1.msra.mxu0 0.0
    %97 = vmatprep.subr.mxu0 0.0
    %98 = vmatpush1.msra.mxu0 0.0
    %99 = vmatprep.subr.mxu0 0.0
    %100 = vmatpush1.msra.mxu0 0.0
    %101 = vmatprep.mubr.f32.mxu0 0.0
    %102 = vmatmul.mubr.f32.gmra.mrb[0].mxu0 %v32
    %v103 = vpop.f32.mrb[0].mxu0
    %v104 = vadd.f32 0.0, %v103
    %v105 = vpop.f32.mrb[0].mxu0
    %106 = vmatprep.mubr.f32.mxu0 0.0
    %107 = vmatmul.mubr.f32.gmra.mrb[0].mxu0 %v35
    %v108 = vpop.f32.mrb[0].mxu0
    %v109 = vadd.f32 0.0, %v108
    %v110 = vpop.f32.mrb[0].mxu0
    %111 = vdwg.mxu0
    %v112 = vadd.f32 %v22, %v104
    %v113 = vadd.f32 %v23, %v109
    %114 = vst.msk [vmem:[#allocation2] sm:$0xff] %vm30, %v112
    %115 = vst.msk [vmem:[#allocation2 + $0x8] sm:$0xff] %vm30, %v113
    // Predicated region
    $region18: #{multi_head_attention.5} parent=1 // pred_check
      %p116 = pneg %p15
    $region19: #{multi_head_attention.5} parent=1 // pred_check_branch
      %118 = sbr.rel (%p116) target = $region21
    $region20: #{multi_head_attention.5} parent=1 // pred_region
      %v119 = vld [vmem:[#allocation2] sm:$0xff]
      %v120 = vld [vmem:[#allocation2 + $0x8] sm:$0xff]
      %v121 = vld [vmem:[%s2] sm:$0x1]
      %v123 = vlaneseq
      %v124 = vshrl.u32 %v123, 7
      %v125 = vsub.s32 0, %v124
      %v126 = vrot.slane %v121, %v125
      %v128 = vadd.f32 %v119, %v126
      %v129 = vadd.f32 %v120, %v126
      %130 = vst.msk [vmem:[#allocation3] sm:$0xff] %vm30, %v128
      %131 = vst.msk [vmem:[#allocation3 + $0x8] sm:$0xff] %vm30, %v129
    $region21: #{multi_head_attention.5} parent=1 // pred_fallthru
      _
    // Predicated region
    $region22: #{multi_head_attention.5} parent=1 // pred_check
      _
    $region23: #{multi_head_attention.5} parent=1 // pred_check_branch
      %133 = sbr.rel (0) target = $region25
    $region24: #{multi_head_attention.5} parent=1 // pred_region
      %s135 = ssub.s32 256, 256
      %136 = vsyncadd [#allocation4], %s135
      %s137 = sshll.u32 [#allocation3], 4
      %s138 = int_to_ptr.vmem [resolvable:$true] %s137
      %143 = dma.vmem_to_hbm [thread:$0]  %s138, 256, %s3, [#allocation4], 128, 128, 8
    $region25: #{multi_head_attention.5} parent=1 // pred_fallthru
      _
    // Predicated region
    $region26: #{multi_head_attention.5} parent=1 // pred_check
      _
    $region27: #{multi_head_attention.5} parent=1 // pred_check_branch
      %145 = sbr.rel (0) target = $region29
    $region28: #{multi_head_attention.5} parent=1 // pred_region
      %146 = dma.done [#allocation4], 256
    $region29: #{multi_head_attention.5} parent=1 // pred_fallthru
      _
    %147 = vsyncpa [#allocation4], 1

// kernel: multi_head_attention.3
$region0: #{multi_head_attention.3}
  #allocation0 [shape = 'u32[]', space=smem, size = 0x4, offset = 0x4, fixed_abs, tag = 'smem constant byte address 0x4 - core index']
  #allocation1 [shape = 'u32[144,128]{1,0:T(1,128)}', space=vmem, size = 0x12000, scoped, tag = 'internal scratch']
  #allocation2 [shape = 'f32[16,96]{1,0:T(8,128)}', space=vmem, size = 0x2000, scoped, tag = 'scratch operand']
  %s0 = inlined_call_operand.hbm [shape: f32[16,32], index: 0, kind: input, shape index: {}]
  %s1 = inlined_call_operand.hbm [shape: f32[32,96], index: 1, kind: input, shape index: {}]
  %s2 = inlined_call_operand.vmem [shape: f32[1,96], index: 2, kind: input, shape index: {}]
  %s3 = inlined_call_operand.vmem [shape: f32[16,96], index: 3, kind: output, shape index: {}]
  %s4 = sld [smem:[#allocation0]]
  $region38: #{multi_head_attention.3} parent=0
    _
  %s6 = ssub.s32 1, %s4
  %s7 = scalar_select 0, %s6, %s4
  $region1: #{multi_head_attention.3} parent=0
    #allocation3 [shape = 'u8[8192]{0}', space=vmem, size = 0x2000, scoped, tag = 'input window, operand 0, single buffered']
    #allocation4 [shape = 's32[1]{0}', space=sflag, size = 0x4, scoped, tag = 'scoped memory for multi_head_attention.3']
    #allocation5 [shape = 'u8[16384]{0}', space=vmem, size = 0x4000, scoped, tag = 'input window, operand 1, single buffered']
    #allocation6 [shape = 's32[1]{0}', space=sflag, size = 0x4, scoped, tag = 'scoped memory for multi_head_attention.3']
    %8 = vsyncpa [#allocation4], 0
    %9 = vsyncpa [#allocation6], 0
    // Predicated region
    $region2: #{multi_head_attention.3} parent=1 // pred_check
      _
    $region3: #{multi_head_attention.3} parent=1 // pred_check_branch
      %11 = sbr.rel (0) target = $region5
    $region4: #{multi_head_attention.3} parent=1 // pred_region
      %s13 = ssub.s32 256, 256
      %14 = vsyncadd [#allocation4], %s13
      %s15 = sshll.u32 [#allocation3], 4
      %s16 = int_to_ptr.vmem [resolvable:$true] %s15
      %21 = dma.hbm_to_vmem [thread:$0]  %s0, 256, %s16, [#allocation4], 128, 128, 8
    $region5: #{multi_head_attention.3} parent=1 // pred_fallthru
      _
    // Predicated region
    $region6: #{multi_head_attention.3} parent=1 // pred_check
      _
    $region7: #{multi_head_attention.3} parent=1 // pred_check_branch
      %23 = sbr.rel (0) target = $region9
    $region8: #{multi_head_attention.3} parent=1 // pred_region
      %s25 = ssub.s32 512, 512
      %26 = vsyncadd [#allocation6], %s25
      %s27 = sshll.u32 [#allocation5], 4
      %s28 = int_to_ptr.vmem [resolvable:$true] %s27
      %33 = dma.hbm_to_vmem [thread:$0]  %s1, 512, %s28, [#allocation6], 128, 128, 8
    $region9: #{multi_head_attention.3} parent=1 // pred_fallthru
      _
    // Predicated region
    $region10: #{multi_head_attention.3} parent=1 // pred_check
      _
    $region11: #{multi_head_attention.3} parent=1 // pred_check_branch
      %35 = sbr.rel (0) target = $region13
    $region12: #{multi_head_attention.3} parent=1 // pred_region
      _
    $region13: #{multi_head_attention.3} parent=1 // pred_fallthru
      _
    // Predicated region
    $region14: #{multi_head_attention.3} parent=1 // pred_check
      _
    $region15: #{multi_head_attention.3} parent=1 // pred_check_branch
      %37 = sbr.rel (0) target = $region17
    $region16: #{multi_head_attention.3} parent=1 // pred_region
      %38 = dma.done [#allocation4], 256
    $region17: #{multi_head_attention.3} parent=1 // pred_fallthru
      _
    // Predicated region
    $region18: #{multi_head_attention.3} parent=1 // pred_check
      _
    $region19: #{multi_head_attention.3} parent=1 // pred_check_branch
      %40 = sbr.rel (0) target = $region21
    $region20: #{multi_head_attention.3} parent=1 // pred_region
      %41 = dma.done [#allocation6], 512
    $region21: #{multi_head_attention.3} parent=1 // pred_fallthru
      _
    %p42 = scmp.eq.s32.totalorder 0, 0
    // Predicated region
    $region22: #{multi_head_attention.3} parent=1 // pred_check
      %p43 = pneg %p42
    $region23: #{multi_head_attention.3} parent=1 // pred_check_branch
      %45 = sbr.rel (%p43) target = $region25
    $region24: #{multi_head_attention.3} parent=1 // pred_region
      %vm46 = vcmask 785408
      %47 = vst.msk [vmem:[#allocation2] sm:$0xff] %vm46, 0.0
      %48 = vst.msk [vmem:[#allocation2 + $0x8] sm:$0xff] %vm46, 0.0
    $region25: #{multi_head_attention.3} parent=1 // pred_fallthru
      _
    %v49 = vld [vmem:[#allocation2] sm:$0xff]
    %v50 = vld [vmem:[#allocation2 + $0x8] sm:$0xff]
    %v51 = vld [vmem:[#allocation3] sm:$0xff]
    %v52 = vld [vmem:[#allocation3 + $0x8] sm:$0xff]
    %v53 = vld [vmem:[#allocation5] sm:$0xff]
    %v54 = vld [vmem:[#allocation5 + $0x8] sm:$0xff]
    %v55 = vld [vmem:[#allocation5 + $0x10] sm:$0xff]
    %v56 = vld [vmem:[#allocation5 + $0x18] sm:$0xff]
    %vm57 = vcmask 261120
    %v59 = vsel %vm57, %v51, 0
    %v62 = vsel %vm57, %v52, 0
    %64 = vmatprep.subr.mxu0 0.0
    %65 = vmatpush1.msra.mxu0 %v53
    %66 = vmatprep.subr.mxu0 0.0
    %67 = vmatpush1.msra.mxu0 %v54
    %68 = vmatprep.subr.mxu0 0.0
    %69 = vmatpush1.msra.mxu0 %v55
    %70 = vmatprep.subr.mxu0 0.0
    %71 = vmatpush1.msra.mxu0 %v56
    %72 = vmatprep.subr.mxu0 0.0
    %73 = vmatpush1.msra.mxu0 0.0
    %74 = vmatprep.subr.mxu0 0.0
    %75 = vmatpush1.msra.mxu0 0.0
    %76 = vmatprep.subr.mxu0 0.0
    %77 = vmatpush1.msra.mxu0 0.0
    %78 = vmatprep.subr.mxu0 0.0
    %79 = vmatpush1.msra.mxu0 0.0
    %80 = vmatprep.subr.mxu0 0.0
    %81 = vmatpush1.msra.mxu0 0.0
    %82 = vmatprep.subr.mxu0 0.0
    %83 = vmatpush1.msra.mxu0 0.0
    %84 = vmatprep.subr.mxu0 0.0
    %85 = vmatpush1.msra.mxu0 0.0
    %86 = vmatprep.subr.mxu0 0.0
    %87 = vmatpush1.msra.mxu0 0.0
    %88 = vmatprep.subr.mxu0 0.0
    %89 = vmatpush1.msra.mxu0 0.0
    %90 = vmatprep.subr.mxu0 0.0
    %91 = vmatpush1.msra.mxu0 0.0
    %92 = vmatprep.subr.mxu0 0.0
    %93 = vmatpush1.msra.mxu0 0.0
    %94 = vmatprep.subr.mxu0 0.0
    %95 = vmatpush1.msra.mxu0 0.0
    %96 = vmatprep.subr.mxu0 0.0
    %97 = vmatpush1.msra.mxu0 0.0
    %98 = vmatprep.subr.mxu0 0.0
    %99 = vmatpush1.msra.mxu0 0.0
    %100 = vmatprep.subr.mxu0 0.0
    %101 = vmatpush1.msra.mxu0 0.0
    %102 = vmatprep.subr.mxu0 0.0
    %103 = vmatpush1.msra.mxu0 0.0
    %104 = vmatprep.subr.mxu0 0.0
    %105 = vmatpush1.msra.mxu0 0.0
    %106 = vmatprep.subr.mxu0 0.0
    %107 = vmatpush1.msra.mxu0 0.0
    %108 = vmatprep.subr.mxu0 0.0
    %109 = vmatpush1.msra.mxu0 0.0
    %110 = vmatprep.subr.mxu0 0.0
    %111 = vmatpush1.msra.mxu0 0.0
    %112 = vmatprep.subr.mxu0 0.0
    %113 = vmatpush1.msra.mxu0 0.0
    %114 = vmatprep.subr.mxu0 0.0
    %115 = vmatpush1.msra.mxu0 0.0
    %116 = vmatprep.subr.mxu0 0.0
    %117 = vmatpush1.msra.mxu0 0.0
    %118 = vmatprep.subr.mxu0 0.0
    %119 = vmatpush1.msra.mxu0 0.0
    %120 = vmatprep.subr.mxu0 0.0
    %121 = vmatpush1.msra.mxu0 0.0
    %122 = vmatprep.subr.mxu0 0.0
    %123 = vmatpush1.msra.mxu0 0.0
    %124 = vmatprep.subr.mxu0 0.0
    %125 = vmatpush1.msra.mxu0 0.0
    %126 = vmatprep.subr.mxu0 0.0
    %127 = vmatpush1.msra.mxu0 0.0
    %128 = vmatprep.mubr.f32.mxu0 0.0
    %129 = vmatmul.mubr.f32.gmra.mrb[0].mxu0 %v59
    %v130 = vpop.f32.mrb[0].mxu0
    %v131 = vadd.f32 0.0, %v130
    %v132 = vpop.f32.mrb[0].mxu0
    %133 = vmatprep.mubr.f32.mxu0 0.0
    %134 = vmatmul.mubr.f32.gmra.mrb[0].mxu0 %v62
    %v135 = vpop.f32.mrb[0].mxu0
    %v136 = vadd.f32 0.0, %v135
    %v137 = vpop.f32.mrb[0].mxu0
    %138 = vdwg.mxu0
    %v139 = vadd.f32 %v49, %v131
    %v140 = vadd.f32 %v50, %v136
    %vm141 = vcmask 785408
    %142 = vst.msk [vmem:[#allocation2] sm:$0xff] %vm141, %v139
    %143 = vst.msk [vmem:[#allocation2 + $0x8] sm:$0xff] %vm141, %v140
    // Predicated region
    $region26: #{multi_head_attention.3} parent=1 // pred_check
      %p144 = pneg %p42
    $region27: #{multi_head_attention.3} parent=1 // pred_check_branch
      %146 = sbr.rel (%p144) target = $region29
    $region28: #{multi_head_attention.3} parent=1 // pred_region
      %v147 = vld [vmem:[#allocation2] sm:$0xff]
      %v148 = vld [vmem:[#allocation2 + $0x8] sm:$0xff]
      %v149 = vld [vmem:[%s2] sm:$0x1]
      %v151 = vlaneseq
      %v152 = vshrl.u32 %v151, 7
      %v153 = vsub.s32 0, %v152
      %v154 = vrot.slane %v149, %v153
      %v156 = vadd.f32 %v147, %v154
      %v157 = vadd.f32 %v148, %v154
      %158 = vst.msk [vmem:[%s3] sm:$0xff] %vm141, %v156
      %159 = vst.msk [vmem:[%s3 + $0x8] sm:$0xff] %vm141, %v157
    $region29: #{multi_head_attention.3} parent=1 // pred_fallthru
      _
    // Predicated region
    $region30: #{multi_head_attention.3} parent=1 // pred_check
      _
    $region31: #{multi_head_attention.3} parent=1 // pred_check_branch
      %161 = sbr.rel (0) target = $region33
    $region32: #{multi_head_attention.3} parent=1 // pred_region
      _
    $region33: #{multi_head_attention.3} parent=1 // pred_fallthru
      _
    // Predicated region
    $region34: #{multi_head_attention.3} parent=1 // pred_check
      _
    $region35: #{multi_head_attention.3} parent=1 // pred_check_branch
      %163 = sbr.rel (0) target = $region37
    $region36: #{multi_head_attention.3} parent=1 // pred_region
      _
    $region37: #{multi_head_attention.3} parent=1 // pred_fallthru
      _
    %164 = vsyncpa [#allocation4], 1
    %165 = vsyncpa [#allocation6], 1

// kernel: multi_head_attention.4
$region0: #{multi_head_attention.4}
  #allocation0 [shape = 'u32[]', space=smem, size = 0x4, offset = 0x4, fixed_abs, tag = 'smem constant byte address 0x4 - core index']
  #allocation1 [shape = 'u32[144,128]{1,0:T(1,128)}', space=vmem, size = 0x12000, scoped, tag = 'internal scratch']
  #allocation2 [shape = 'f32[4,8,1]{2,1,0:T(8,128)}', space=vmem, size = 0x4000, scoped, tag = 'scratch operand']
  #allocation3 [shape = 'f32[4,8,1]{2,1,0:T(8,128)}', space=vmem, size = 0x4000, scoped, tag = 'scratch operand']
  #allocation4 [shape = 'f32[4,8,8]{2,1,0:T(8,128)}', space=vmem, size = 0x4000, scoped, tag = 'scratch operand']
  %s0 = inlined_call_operand.vmem [shape: f32[2,8,32], index: 0, kind: input, shape index: {}]
  %s1 = inlined_call_operand.vmem [shape: f32[2,8,32], index: 1, kind: input, shape index: {}]
  %s2 = inlined_call_operand.vmem [shape: f32[2,8,32], index: 2, kind: input, shape index: {}]
  %s3 = inlined_call_operand.vmem [shape: f32[2,8,32], index: 3, kind: output, shape index: {}]
  %s4 = sld [smem:[#allocation0]]
  $region53: #{multi_head_attention.4} parent=0
    _
  %s6 = ssub.s32 1, %s4
  %s7 = scalar_select 0, %s6, %s4
  loop: start=0, step=1, limit=4
  $region2: #{multi_head_attention.4} parent=0 // loop_pre_header
    _
  $region3: #{multi_head_attention.4} parent=0 // loop_header
    %s9 = sphi 0, %s13
    %p10 = scmp.ge.s32.totalorder %s9, 4
    %s16 = sphi 0, %s42
    %s17 = sphi 0, %s38
    %s18 = sphi 0, %s34
    %s19 = sphi 0, %s30
    %s20 = sphi 0, %s16
    %s21 = sphi 0, %s17
    %s22 = sphi 0, %s18
    %s23 = sphi 0, %s19
    %s24 = sphi 0, %s20
    %s25 = sphi 0, %s21
    %s26 = sphi 0, %s22
    %s27 = sphi 0, %s23
    %s49 = sphi 0, %s51
    %s52 = sphi 0, %s49
    %s53 = sphi 0, %s52
    %s69 = sphi 0, %s53
    %s79 = sphi 0, %s81
    %s82 = sphi 0, %s79
    %s83 = sphi 0, %s82
    %s99 = sphi 0, %s83
    %s109 = sphi 0, %s111
    %s112 = sphi 0, %s109
    %s113 = sphi 0, %s112
    %s129 = sphi 0, %s113
    %s139 = sphi 0, %s141
    %s142 = sphi 0, %s139
    %s143 = sphi 0, %s142
    %s159 = sphi 0, %s143
  $region4: #{multi_head_attention.4} parent=0 // loop_header_branch
    %12 = sbr.rel (%p10) target = $region8
  $region5: #{multi_head_attention.4} parent=0 // loop_body
    %s14 = ssub.s32 %s9, 1
    %s15 = ssub.s32 %s9, 2
    %s28 = sadd.s32 1, %s19
    %p29 = scmp.ge.s32.totalorder %s28, 1
    %s30 = scalar_select %p29, 0, %s28
    %s31 = sadd.s32 1, %s18
    %s32 = scalar_select %p29, %s31, %s18
    %p33 = scmp.ge.s32.totalorder %s32, 1
    %s34 = scalar_select %p33, 0, %s32
    %s35 = sadd.s32 1, %s17
    %s36 = scalar_select %p33, %s35, %s17
    %p37 = scmp.ge.s32.totalorder %s36, 1
    %s38 = scalar_select %p37, 0, %s36
    %s39 = sadd.s32 1, %s16
    %s40 = scalar_select %p37, %s39, %s16
    %p41 = scmp.ge.s32.totalorder %s40, 2
    %s42 = scalar_select %p41, 0, %s40
    %s43 = ssub.s32 %s16, %s42
    %s44 = ssub.s32 %s18, %s34
    %s45 = sor.u32 %s43, %s44
    %s46 = ssub.s32 %s17, %s38
    %s47 = sor.u32 %s45, %s46
    %p48 = scmp.eq.s32.totalorder %s47, 0
    %s50 = sadd.s32 %s49, 1
    %s51 = scalar_select %p48, %s49, %s50
    %p54 = pneg %p48
    %p55 = scmp.eq.s32.totalorder %s9, 1
    %p56 = por %p54, %p55
    %p57 = scmp.ne.s32.totalorder %s49, %s52
    %p58 = scmp.eq.s32.totalorder %s9, 0
    %p59 = por %p57, %p58
    %p60 = scmp.ne.s32.totalorder %s49, %s52
    %p61 = scmp.eq.s32.totalorder %s14, 1
    %p62 = por %p60, %p61
    %p63 = scmp.ne.s32.totalorder %s52, %s53
    %p64 = scmp.eq.s32.totalorder %s14, 0
    %p65 = por %p63, %p64
    %p66 = scmp.ne.s32.totalorder %s52, %s53
    %p67 = scmp.eq.s32.totalorder %s15, 1
    %p68 = por %p66, %p67
    %p70 = scmp.ne.s32.totalorder %s53, %s69
    %p71 = scmp.eq.s32.totalorder %s15, 0
    %p72 = por %p70, %p71
    %s73 = ssub.s32 %s16, %s42
    %s74 = ssub.s32 %s19, %s30
    %s75 = sor.u32 %s73, %s74
    %s76 = ssub.s32 %s17, %s38
    %s77 = sor.u32 %s75, %s76
    %p78 = scmp.eq.s32.totalorder %s77, 0
    %s80 = sadd.s32 %s79, 1
    %s81 = scalar_select %p78, %s79, %s80
    %p84 = pneg %p78
    %p85 = scmp.eq.s32.totalorder %s9, 1
    %p86 = por %p84, %p85
    %p87 = scmp.ne.s32.totalorder %s79, %s82
    %p88 = scmp.eq.s32.totalorder %s9, 0
    %p89 = por %p87, %p88
    %p90 = scmp.ne.s32.totalorder %s79, %s82
    %p91 = scmp.eq.s32.totalorder %s14, 1
    %p92 = por %p90, %p91
    %p93 = scmp.ne.s32.totalorder %s82, %s83
    %p94 = scmp.eq.s32.totalorder %s14, 0
    %p95 = por %p93, %p94
    %p96 = scmp.ne.s32.totalorder %s82, %s83
    %p97 = scmp.eq.s32.totalorder %s15, 1
    %p98 = por %p96, %p97
    %p100 = scmp.ne.s32.totalorder %s83, %s99
    %p101 = scmp.eq.s32.totalorder %s15, 0
    %p102 = por %p100, %p101
    %s103 = ssub.s32 %s16, %s42
    %s104 = ssub.s32 %s19, %s30
    %s105 = sor.u32 %s103, %s104
    %s106 = ssub.s32 %s17, %s38
    %s107 = sor.u32 %s105, %s106
    %p108 = scmp.eq.s32.totalorder %s107, 0
    %s110 = sadd.s32 %s109, 1
    %s111 = scalar_select %p108, %s109, %s110
    %p114 = pneg %p108
    %p115 = scmp.eq.s32.totalorder %s9, 1
    %p116 = por %p114, %p115
    %p117 = scmp.ne.s32.totalorder %s109, %s112
    %p118 = scmp.eq.s32.totalorder %s9, 0
    %p119 = por %p117, %p118
    %p120 = scmp.ne.s32.totalorder %s109, %s112
    %p121 = scmp.eq.s32.totalorder %s14, 1
    %p122 = por %p120, %p121
    %p123 = scmp.ne.s32.totalorder %s112, %s113
    %p124 = scmp.eq.s32.totalorder %s14, 0
    %p125 = por %p123, %p124
    %p126 = scmp.ne.s32.totalorder %s112, %s113
    %p127 = scmp.eq.s32.totalorder %s15, 1
    %p128 = por %p126, %p127
    %p130 = scmp.ne.s32.totalorder %s113, %s129
    %p131 = scmp.eq.s32.totalorder %s15, 0
    %p132 = por %p130, %p131
    %s133 = ssub.s32 %s16, %s42
    %s134 = ssub.s32 %s18, %s34
    %s135 = sor.u32 %s133, %s134
    %s136 = ssub.s32 %s17, %s38
    %s137 = sor.u32 %s135, %s136
    %p138 = scmp.eq.s32.totalorder %s137, 0
    %s140 = sadd.s32 %s139, 1
    %s141 = scalar_select %p138, %s139, %s140
    %p144 = pneg %p138
    %p145 = scmp.eq.s32.totalorder %s9, 1
    %p146 = por %p144, %p145
    %p147 = scmp.ne.s32.totalorder %s139, %s142
    %p148 = scmp.eq.s32.totalorder %s9, 0
    %p149 = por %p147, %p148
    %p150 = scmp.ne.s32.totalorder %s139, %s142
    %p151 = scmp.eq.s32.totalorder %s14, 1
    %p152 = por %p150, %p151
    %p153 = scmp.ne.s32.totalorder %s142, %s143
    %p154 = scmp.eq.s32.totalorder %s14, 0
    %p155 = por %p153, %p154
    %p156 = scmp.ne.s32.totalorder %s142, %s143
    %p157 = scmp.eq.s32.totalorder %s15, 1
    %p158 = por %p156, %p157
    %p160 = scmp.ne.s32.totalorder %s143, %s159
    %p161 = scmp.eq.s32.totalorder %s15, 0
    %p162 = por %p160, %p161
    %p163 = scmp.le.s32.totalorder 1, %s9
    %p164 = scmp.lt.s32.totalorder %s9, 3
    %p165 = pnand %p163, %p164
    %p166 = pneg %p165
    // Predicated region
    $region9: #{multi_head_attention.4} parent=5 // pred_check
      _
    $region10: #{multi_head_attention.4} parent=5 // pred_check_branch
      %168 = sbr.rel (%p165) target = $region12
    $region11: #{multi_head_attention.4} parent=5 // pred_region
      %s169 = ssub.s32 %s9, 1
    $region12: #{multi_head_attention.4} parent=5 // pred_fallthru
      _
    %p170 = scmp.lt.s32.totalorder %s9, 2
    // Predicated region
    $region13: #{multi_head_attention.4} parent=5 // pred_check
      %p171 = pneg %p170
    $region14: #{multi_head_attention.4} parent=5 // pred_check_branch
      %173 = sbr.rel (%p171) target = $region16
    $region15: #{multi_head_attention.4} parent=5 // pred_region
      // Predicated region
      $region17: #{multi_head_attention.4} parent=15 // pred_check
        %p174 = pneg %p59
      $region18: #{multi_head_attention.4} parent=15 // pred_check_branch
        %176 = sbr.rel (%p174) target = $region20
      $region19: #{multi_head_attention.4} parent=15 // pred_region
        %p177 = scmp.lt.s32.totalorder %s16, 1
        %s178 = scalar_select %p177, %s16, 1
        %p179 = scmp.lt.s32.totalorder %s18, 0
        %s180 = scalar_select %p179, %s18, 0
        %p181 = scmp.lt.s32.totalorder %s17, 0
        %s182 = scalar_select %p181, %s17, 0
        %s183 = sadd.s32 %s182, %s180
        %s184 = sadd.s32 %s183, %s178
        %s185 = smul.addr %s184, 8
        %s186 = scalar_lea.vmem %s0, %s185
      $region20: #{multi_head_attention.4} parent=15 // pred_fallthru
        _
      // Predicated region
      $region21: #{multi_head_attention.4} parent=15 // pred_check
        %p187 = pneg %p89
      $region22: #{multi_head_attention.4} parent=15 // pred_check_branch
        %189 = sbr.rel (%p187) target = $region24
      $region23: #{multi_head_attention.4} parent=15 // pred_region
        %p190 = scmp.lt.s32.totalorder %s16, 1
        %s191 = scalar_select %p190, %s16, 1
        %p192 = scmp.lt.s32.totalorder %s19, 0
        %s193 = scalar_select %p192, %s19, 0
        %p194 = scmp.lt.s32.totalorder %s17, 0
        %s195 = scalar_select %p194, %s17, 0
        %s196 = sadd.s32 %s195, %s193
        %s197 = sadd.s32 %s196, %s191
        %s198 = smul.addr %s197, 8
        %s199 = scalar_lea.vmem %s1, %s198
      $region24: #{multi_head_attention.4} parent=15 // pred_fallthru
        _
      // Predicated region
      $region25: #{multi_head_attention.4} parent=15 // pred_check
        %p200 = pneg %p119
      $region26: #{multi_head_attention.4} parent=15 // pred_check_branch
        %202 = sbr.rel (%p200) target = $region28
      $region27: #{multi_head_attention.4} parent=15 // pred_region
        %p203 = scmp.lt.s32.totalorder %s16, 1
        %s204 = scalar_select %p203, %s16, 1
        %p205 = scmp.lt.s32.totalorder %s19, 0
        %s206 = scalar_select %p205, %s19, 0
        %p207 = scmp.lt.s32.totalorder %s17, 0
        %s208 = scalar_select %p207, %s17, 0
        %s209 = sadd.s32 %s208, %s206
        %s210 = sadd.s32 %s209, %s204
        %s211 = smul.addr %s210, 8
        %s212 = scalar_lea.vmem %s2, %s211
      $region28: #{multi_head_attention.4} parent=15 // pred_fallthru
        _
    $region16: #{multi_head_attention.4} parent=5 // pred_fallthru
      _
    %p213 = scmp.le.s32.totalorder 1, %s9
    %p214 = scmp.lt.s32.totalorder %s9, 3
    %p215 = pnand %p213, %p214
    %p216 = pneg %p215
    // Predicated region
    $region29: #{multi_head_attention.4} parent=5 // pred_check
      _
    $region30: #{multi_head_attention.4} parent=5 // pred_check_branch
      %218 = sbr.rel (%p215) target = $region32
    $region31: #{multi_head_attention.4} parent=5 // pred_region
      %s219 = ssub.s32 %s9, 1
      %p220 = scmp.lt.s32.totalorder %s20, 1
      %s221 = scalar_select %p220, %s20, 1
      %p222 = scmp.lt.s32.totalorder %s22, 0
      %s223 = scalar_select %p222, %s22, 0
      %p224 = scmp.lt.s32.totalorder %s21, 0
      %s225 = scalar_select %p224, %s21, 0
      %s226 = sadd.s32 %s225, %s223
      %s227 = sadd.s32 %s226, %s221
      %s228 = smul.addr %s227, 8
      %s229 = scalar_lea.vmem %s0, %s228
      %p230 = pneg %p65
      %p231 = pneg %p62
      %p232 = scmp.lt.s32.totalorder %s20, 1
      %s233 = scalar_select %p232, %s20, 1
      %p234 = scmp.lt.s32.totalorder %s23, 0
      %s235 = scalar_select %p234, %s23, 0
      %p236 = scmp.lt.s32.totalorder %s21, 0
      %s237 = scalar_select %p236, %s21, 0
      %s238 = sadd.s32 %s237, %s235
      %s239 = sadd.s32 %s238, %s233
      %s240 = smul.addr %s239, 8
      %s241 = scalar_lea.vmem %s1, %s240
      %p242 = pneg %p95
      %p243 = pneg %p92
      %p244 = scmp.lt.s32.totalorder %s20, 1
      %s245 = scalar_select %p244, %s20, 1
      %p246 = scmp.lt.s32.totalorder %s23, 0
      %s247 = scalar_select %p246, %s23, 0
      %p248 = scmp.lt.s32.totalorder %s21, 0
      %s249 = scalar_select %p248, %s21, 0
      %s250 = sadd.s32 %s249, %s247
      %s251 = sadd.s32 %s250, %s245
      %s252 = smul.addr %s251, 8
      %s253 = scalar_lea.vmem %s2, %s252
      %p254 = pneg %p125
      %p255 = pneg %p122
      %p256 = pneg %p155
      %p257 = pneg %p152
      %p258 = scmp.lt.s32.totalorder %s20, 1
      %s259 = scalar_select %p258, %s20, 1
      %p260 = scmp.lt.s32.totalorder %s22, 0
      %s261 = scalar_select %p260, %s22, 0
      %p262 = scmp.lt.s32.totalorder %s21, 0
      %s263 = scalar_select %p262, %s21, 0
      %s264 = sadd.s32 %s263, %s261
      %s265 = sadd.s32 %s264, %s259
      %s266 = smul.addr %s265, 8
      %s267 = scalar_lea.vmem %s3, %s266
      %p268 = scmp.lt.s32.totalorder %s20, 1
      %s269 = scalar_select %p268, %s20, 1
      %p270 = scmp.lt.s32.totalorder %s22, 0
      %s271 = scalar_select %p270, %s22, 0
      %p272 = scmp.lt.s32.totalorder %s21, 0
      %s273 = scalar_select %p272, %s21, 0
      %s274 = sadd.s32 %s273, %s271
      %s275 = sadd.s32 %s274, %s269
      %s276 = smul.addr %s275, 8
      %s277 = scalar_lea.vmem %s0, %s276
      %p278 = scmp.lt.s32.totalorder %s20, 1
      %s279 = scalar_select %p278, %s20, 1
      %p280 = scmp.lt.s32.totalorder %s23, 0
      %s281 = scalar_select %p280, %s23, 0
      %p282 = scmp.lt.s32.totalorder %s21, 0
      %s283 = scalar_select %p282, %s21, 0
      %s284 = sadd.s32 %s283, %s281
      %s285 = sadd.s32 %s284, %s279
      %s286 = smul.addr %s285, 8
      %s287 = scalar_lea.vmem %s1, %s286
      %p288 = scmp.lt.s32.totalorder %s20, 1
      %s289 = scalar_select %p288, %s20, 1
      %p290 = scmp.lt.s32.totalorder %s23, 0
      %s291 = scalar_select %p290, %s23, 0
      %p292 = scmp.lt.s32.totalorder %s21, 0
      %s293 = scalar_select %p292, %s21, 0
      %s294 = sadd.s32 %s293, %s291
      %s295 = sadd.s32 %s294, %s289
      %s296 = smul.addr %s295, 8
      %s297 = scalar_lea.vmem %s2, %s296
      %p298 = scmp.lt.s32.totalorder %s20, 1
      %s299 = scalar_select %p298, %s20, 1
      %p300 = scmp.lt.s32.totalorder %s22, 0
      %s301 = scalar_select %p300, %s22, 0
      %p302 = scmp.lt.s32.totalorder %s21, 0
      %s303 = scalar_select %p302, %s21, 0
      %s304 = sadd.s32 %s303, %s301
      %s305 = sadd.s32 %s304, %s299
      %s306 = smul.addr %s305, 8
      %s307 = scalar_lea.vmem %s3, %s306
      %p308 = scmp.eq.s32.totalorder %s23, 0
      // Predicated region
      $region33: #{multi_head_attention.4} parent=31 // pred_check
        %p309 = pneg %p308
      $region34: #{multi_head_attention.4} parent=31 // pred_check_branch
        %311 = sbr.rel (%p309) target = $region36
      $region35: #{multi_head_attention.4} parent=31 // pred_region
        %vm312 = vcmask 7168
        %313 = vst.msk [vmem:[#allocation2] sm:$0xff] %vm312, -inf
        %314 = vst.msk [vmem:[#allocation2 + $0x8] sm:$0xff] %vm312, -inf
        %315 = vst.msk [vmem:[#allocation2 + $0x10] sm:$0xff] %vm312, -inf
        %316 = vst.msk [vmem:[#allocation2 + $0x18] sm:$0xff] %vm312, -inf
        %317 = vst.msk [vmem:[#allocation3] sm:$0xff] %vm312, 0.0
        %318 = vst.msk [vmem:[#allocation3 + $0x8] sm:$0xff] %vm312, 0.0
        %319 = vst.msk [vmem:[#allocation3 + $0x10] sm:$0xff] %vm312, 0.0
        %320 = vst.msk [vmem:[#allocation3 + $0x18] sm:$0xff] %vm312, 0.0
        %vm321 = vcmask 64512
        %322 = vst.msk [vmem:[#allocation4] sm:$0xff] %vm321, 0.0
        %323 = vst.msk [vmem:[#allocation4 + $0x8] sm:$0xff] %vm321, 0.0
        %324 = vst.msk [vmem:[#allocation4 + $0x10] sm:$0xff] %vm321, 0.0
        %325 = vst.msk [vmem:[#allocation4 + $0x18] sm:$0xff] %vm321, 0.0
      $region36: #{multi_head_attention.4} parent=31 // pred_fallthru
        _
      %v326 = vld [vmem:[%s277] sm:$0xff]
      %v327 = vld [vmem:[%s287] sm:$0xff]
      %v328 = vld [vmem:[%s297] sm:$0xff]
      %vm329 = vcmask 64512
      %v331 = vsel %vm329, %v326, 0
      %v334 = vsel %vm329, %v327, 0
      %336 = vmatprep.subr.mxu0 0.0
      %337 = vmatpush1.xpose.msra.mxu0 %v334
      %338 = vmatprep.subr.mxu0 0.0
      %339 = vmatpush1.xpose.msra.mxu0 0.0
      %340 = vmatprep.subr.mxu0 0.0
      %341 = vmatpush1.xpose.msra.mxu0 0.0
      %342 = vmatprep.subr.mxu0 0.0
      %343 = vmatpush1.xpose.msra.mxu0 0.0
      %344 = vmatprep.subr.mxu0 0.0
      %345 = vmatpush1.xpose.msra.mxu0 0.0
      %346 = vmatprep.subr.mxu0 0.0
      %347 = vmatpush1.xpose.msra.mxu0 0.0
      %348 = vmatprep.subr.mxu0 0.0
      %349 = vmatpush1.xpose.msra.mxu0 0.0
      %350 = vmatprep.subr.mxu0 0.0
      %351 = vmatpush1.xpose.msra.mxu0 0.0
      %352 = vmatprep.subr.mxu0 0.0
      %353 = vmatpush1.xpose.msra.mxu0 0.0
      %354 = vmatprep.subr.mxu0 0.0
      %355 = vmatpush1.xpose.msra.mxu0 0.0
      %356 = vmatprep.subr.mxu0 0.0
      %357 = vmatpush1.xpose.msra.mxu0 0.0
      %358 = vmatprep.subr.mxu0 0.0
      %359 = vmatpush1.xpose.msra.mxu0 0.0
      %360 = vmatprep.subr.mxu0 0.0
      %361 = vmatpush1.xpose.msra.mxu0 0.0
      %362 = vmatprep.subr.mxu0 0.0
      %363 = vmatpush1.xpose.msra.mxu0 0.0
      %364 = vmatprep.subr.mxu0 0.0
      %365 = vmatpush1.xpose.msra.mxu0 0.0
      %366 = vmatprep.subr.mxu0 0.0
      %367 = vmatpush1.xpose.msra.mxu0 0.0
      %368 = vmatprep.subr.mxu0 0.0
      %369 = vmatpush1.xpose.msra.mxu0 0.0
      %370 = vmatprep.subr.mxu0 0.0
      %371 = vmatpush1.xpose.msra.mxu0 0.0
      %372 = vmatprep.subr.mxu0 0.0
      %373 = vmatpush1.xpose.msra.mxu0 0.0
      %374 = vmatprep.subr.mxu0 0.0
      %375 = vmatpush1.xpose.msra.mxu0 0.0
      %376 = vmatprep.subr.mxu0 0.0
      %377 = vmatpush1.xpose.msra.mxu0 0.0
      %378 = vmatprep.subr.mxu0 0.0
      %379 = vmatpush1.xpose.msra.mxu0 0.0
      %380 = vmatprep.subr.mxu0 0.0
      %381 = vmatpush1.xpose.msra.mxu0 0.0
      %382 = vmatprep.subr.mxu0 0.0
      %383 = vmatpush1.xpose.msra.mxu0 0.0
      %384 = vmatprep.subr.mxu0 0.0
      %385 = vmatpush1.xpose.msra.mxu0 0.0
      %386 = vmatprep.subr.mxu0 0.0
      %387 = vmatpush1.xpose.msra.mxu0 0.0
      %388 = vmatprep.subr.mxu0 0.0
      %389 = vmatpush1.xpose.msra.mxu0 0.0
      %390 = vmatprep.subr.mxu0 0.0
      %391 = vmatpush1.xpose.msra.mxu0 0.0
      %392 = vmatprep.subr.mxu0 0.0
      %393 = vmatpush1.xpose.msra.mxu0 0.0
      %394 = vmatprep.subr.mxu0 0.0
      %395 = vmatpush1.xpose.msra.mxu0 0.0
      %396 = vmatprep.subr.mxu0 0.0
      %397 = vmatpush1.xpose.msra.mxu0 0.0
      %398 = vmatprep.subr.mxu0 0.0
      %399 = vmatpush1.xpose.msra.mxu0 0.0
      %400 = vmatprep.mubr.f32.mxu0 0.0
      %401 = vmatmul.mubr.f32.gmra.mrb[0].mxu0 %v331
      %v402 = vpop.f32.mrb[0].mxu0
      %v403 = vadd.f32 0.0, %v402
      %v404 = vpop.f32.mrb[0].mxu0
      %405 = vdwg.mxu0
      %v406 = vld [vmem:[#allocation2] sm:$0xff]
      %v407 = vsel %vm329, %v403, -inf
      %408 = vmax.xlane.f32.xlu0 %v407
      %v409 = vpop.xlane.xlu0 %408
      %v410 = vmax.f32 %v406, %v409
      %v411 = vsub.f32 %v406, %v410
      %v412 = vmul.f32 %v411, 1.442695
      %v413 = vpow.pop %v412
      %415 = vset.pattern.permute.xlu0 0
      %416 = vperm.xlu0 %415, %v410
      %v417 = vpop.permute.xlu0 %416
      %v419 = vsub.f32 %v403, %v417
      %v420 = vmul.f32 %v419, 1.442695
      %v421 = vpow.pop %v420
      %v422 = vld [vmem:[#allocation3] sm:$0xff]
      %v423 = vmul.f32 %v413, %v422
      %v424 = vsel %vm329, %v421, 0.0
      %425 = vadd.xlane.f32.xlu0 %v424
      %v426 = vpop.xlane.xlu0 %425
      %v427 = vadd.f32 %v423, %v426
      %vm428 = vcmask 7168
      %429 = vst.msk [vmem:[#allocation3] sm:$0xff] %vm428, %v427
      %v430 = vld [vmem:[#allocation4] sm:$0xff]
      %432 = vset.pattern.permute.xlu0 0
      %433 = vperm.xlu0 %432, %v413
      %v434 = vpop.permute.xlu0 %433
      %v436 = vmul.f32 %v434, %v430
      %v438 = vsel %vm329, %v421, 0
      %440 = vmatprep.subr.mxu0 0.0
      %441 = vmatpush1.msra.mxu0 %v328
      %442 = vmatprep.subr.mxu0 0.0
      %443 = vmatpush1.msra.mxu0 0.0
      %444 = vmatprep.subr.mxu0 0.0
      %445 = vmatpush1.msra.mxu0 0.0
      %446 = vmatprep.subr.mxu0 0.0
      %447 = vmatpush1.msra.mxu0 0.0
      %448 = vmatprep.subr.mxu0 0.0
      %449 = vmatpush1.msra.mxu0 0.0
      %450 = vmatprep.subr.mxu0 0.0
      %451 = vmatpush1.msra.mxu0 0.0
      %452 = vmatprep.subr.mxu0 0.0
      %453 = vmatpush1.msra.mxu0 0.0
      %454 = vmatprep.subr.mxu0 0.0
      %455 = vmatpush1.msra.mxu0 0.0
      %456 = vmatprep.subr.mxu0 0.0
      %457 = vmatpush1.msra.mxu0 0.0
      %458 = vmatprep.subr.mxu0 0.0
      %459 = vmatpush1.msra.mxu0 0.0
      %460 = vmatprep.subr.mxu0 0.0
      %461 = vmatpush1.msra.mxu0 0.0
      %462 = vmatprep.subr.mxu0 0.0
      %463 = vmatpush1.msra.mxu0 0.0
      %464 = vmatprep.subr.mxu0 0.0
      %465 = vmatpush1.msra.mxu0 0.0
      %466 = vmatprep.subr.mxu0 0.0
      %467 = vmatpush1.msra.mxu0 0.0
      %468 = vmatprep.subr.mxu0 0.0
      %469 = vmatpush1.msra.mxu0 0.0
      %470 = vmatprep.subr.mxu0 0.0
      %471 = vmatpush1.msra.mxu0 0.0
      %472 = vmatprep.subr.mxu0 0.0
      %473 = vmatpush1.msra.mxu0 0.0
      %474 = vmatprep.subr.mxu0 0.0
      %475 = vmatpush1.msra.mxu0 0.0
      %476 = vmatprep.subr.mxu0 0.0
      %477 = vmatpush1.msra.mxu0 0.0
      %478 = vmatprep.subr.mxu0 0.0
      %479 = vmatpush1.msra.mxu0 0.0
      %480 = vmatprep.subr.mxu0 0.0
      %481 = vmatpush1.msra.mxu0 0.0
      %482 = vmatprep.subr.mxu0 0.0
      %483 = vmatpush1.msra.mxu0 0.0
      %484 = vmatprep.subr.mxu0 0.0
      %485 = vmatpush1.msra.mxu0 0.0
      %486 = vmatprep.subr.mxu0 0.0
      %487 = vmatpush1.msra.mxu0 0.0
      %488 = vmatprep.subr.mxu0 0.0
      %489 = vmatpush1.msra.mxu0 0.0
      %490 = vmatprep.subr.mxu0 0.0
      %491 = vmatpush1.msra.mxu0 0.0
      %492 = vmatprep.subr.mxu0 0.0
      %493 = vmatpush1.msra.mxu0 0.0
      %494 = vmatprep.subr.mxu0 0.0
      %495 = vmatpush1.msra.mxu0 0.0
      %496 = vmatprep.subr.mxu0 0.0
      %497 = vmatpush1.msra.mxu0 0.0
      %498 = vmatprep.subr.mxu0 0.0
      %499 = vmatpush1.msra.mxu0 0.0
      %500 = vmatprep.subr.mxu0 0.0
      %501 = vmatpush1.msra.mxu0 0.0
      %502 = vmatprep.subr.mxu0 0.0
      %503 = vmatpush1.msra.mxu0 0.0
      %504 = vmatprep.mubr.f32.mxu0 0.0
      %505 = vmatmul.mubr.f32.gmra.mrb[0].mxu0 %v438
      %v506 = vpop.f32.mrb[0].mxu0
      %v507 = vadd.f32 0.0, %v506
      %v508 = vpop.f32.mrb[0].mxu0
      %509 = vdwg.mxu0
      %v510 = vadd.f32 %v436, %v507
      %511 = vst.msk [vmem:[#allocation4] sm:$0xff] %vm329, %v510
      %512 = vst.msk [vmem:[#allocation2] sm:$0xff] %vm428, %v410
      %v513 = vld [vmem:[%s277] sm:$0xff]
      %v514 = vld [vmem:[%s287] sm:$0xff]
      %v515 = vld [vmem:[%s297] sm:$0xff]
      %517 = vrot.lane.b32.xlu0 %v513, 120
      %v518 = vpop.permute.xlu0 %517
      %520 = vrot.lane.b32.xlu0 %v514, 120
      %v521 = vpop.permute.xlu0 %520
      %v522 = vsel %vm329, %v518, 0
      %v524 = vsel %vm329, %v521, 0
      %526 = vmatprep.subr.mxu0 0.0
      %527 = vmatpush1.xpose.msra.mxu0 %v524
      %528 = vmatprep.subr.mxu0 0.0
      %529 = vmatpush1.xpose.msra.mxu0 0.0
      %530 = vmatprep.subr.mxu0 0.0
      %531 = vmatpush1.xpose.msra.mxu0 0.0
      %532 = vmatprep.subr.mxu0 0.0
      %533 = vmatpush1.xpose.msra.mxu0 0.0
      %534 = vmatprep.subr.mxu0 0.0
      %535 = vmatpush1.xpose.msra.mxu0 0.0
      %536 = vmatprep.subr.mxu0 0.0
      %537 = vmatpush1.xpose.msra.mxu0 0.0
      %538 = vmatprep.subr.mxu0 0.0
      %539 = vmatpush1.xpose.msra.mxu0 0.0
      %540 = vmatprep.subr.mxu0 0.0
      %541 = vmatpush1.xpose.msra.mxu0 0.0
      %542 = vmatprep.subr.mxu0 0.0
      %543 = vmatpush1.xpose.msra.mxu0 0.0
      %544 = vmatprep.subr.mxu0 0.0
      %545 = vmatpush1.xpose.msra.mxu0 0.0
      %546 = vmatprep.subr.mxu0 0.0
      %547 = vmatpush1.xpose.msra.mxu0 0.0
      %548 = vmatprep.subr.mxu0 0.0
      %549 = vmatpush1.xpose.msra.mxu0 0.0
      %550 = vmatprep.subr.mxu0 0.0
      %551 = vmatpush1.xpose.msra.mxu0 0.0
      %552 = vmatprep.subr.mxu0 0.0
      %553 = vmatpush1.xpose.msra.mxu0 0.0
      %554 = vmatprep.subr.mxu0 0.0
      %555 = vmatpush1.xpose.msra.mxu0 0.0
      %556 = vmatprep.subr.mxu0 0.0
      %557 = vmatpush1.xpose.msra.mxu0 0.0
      %558 = vmatprep.subr.mxu0 0.0
      %559 = vmatpush1.xpose.msra.mxu0 0.0
      %560 = vmatprep.subr.mxu0 0.0
      %561 = vmatpush1.xpose.msra.mxu0 0.0
      %562 = vmatprep.subr.mxu0 0.0
      %563 = vmatpush1.xpose.msra.mxu0 0.0
      %564 = vmatprep.subr.mxu0 0.0
      %565 = vmatpush1.xpose.msra.mxu0 0.0
      %566 = vmatprep.subr.mxu0 0.0
      %567 = vmatpush1.xpose.msra.mxu0 0.0
      %568 = vmatprep.subr.mxu0 0.0
      %569 = vmatpush1.xpose.msra.mxu0 0.0
      %570 = vmatprep.subr.mxu0 0.0
      %571 = vmatpush1.xpose.msra.mxu0 0.0
      %572 = vmatprep.subr.mxu0 0.0
      %573 = vmatpush1.xpose.msra.mxu0 0.0
      %574 = vmatprep.subr.mxu0 0.0
      %575 = vmatpush1.xpose.msra.mxu0 0.0
      %576 = vmatprep.subr.mxu0 0.0
      %577 = vmatpush1.xpose.msra.mxu0 0.0
      %578 = vmatprep.subr.mxu0 0.0
      %579 = vmatpush1.xpose.msra.mxu0 0.0
      %580 = vmatprep.subr.mxu0 0.0
      %581 = vmatpush1.xpose.msra.mxu0 0.0
      %582 = vmatprep.subr.mxu0 0.0
      %583 = vmatpush1.xpose.msra.mxu0 0.0
      %584 = vmatprep.subr.mxu0 0.0
      %585 = vmatpush1.xpose.msra.mxu0 0.0
      %586 = vmatprep.subr.mxu0 0.0
      %587 = vmatpush1.xpose.msra.mxu0 0.0
      %588 = vmatprep.subr.mxu0 0.0
      %589 = vmatpush1.xpose.msra.mxu0 0.0
      %590 = vmatprep.mubr.f32.mxu0 0.0
      %591 = vmatmul.mubr.f32.gmra.mrb[0].mxu0 %v522
      %v592 = vpop.f32.mrb[0].mxu0
      %v593 = vadd.f32 0.0, %v592
      %v594 = vpop.f32.mrb[0].mxu0
      %595 = vdwg.mxu0
      %s596 = scalar_lea.vmem [#allocation2], 8
      %v597 = vld [vmem:[%s596] sm:$0xff]
      %v598 = vsel %vm329, %v593, -inf
      %599 = vmax.xlane.f32.xlu0 %v598
      %v600 = vpop.xlane.xlu0 %599
      %v601 = vmax.f32 %v597, %v600
      %v602 = vsub.f32 %v597, %v601
      %v603 = vmul.f32 %v602, 1.442695
      %v604 = vpow.pop %v603
      %606 = vset.pattern.permute.xlu0 0
      %607 = vperm.xlu0 %606, %v601
      %v608 = vpop.permute.xlu0 %607
      %v610 = vsub.f32 %v593, %v608
      %v611 = vmul.f32 %v610, 1.442695
      %v612 = vpow.pop %v611
      %s613 = scalar_lea.vmem [#allocation3], 8
      %v614 = vld [vmem:[%s613] sm:$0xff]
      %v615 = vmul.f32 %v604, %v614
      %v616 = vsel %vm329, %v612, 0.0
      %617 = vadd.xlane.f32.xlu0 %v616
      %v618 = vpop.xlane.xlu0 %617
      %v619 = vadd.f32 %v615, %v618
      %620 = vst.msk [vmem:[%s613] sm:$0xff] %vm428, %v619
      %s621 = scalar_lea.vmem [#allocation4], 8
      %v622 = vld [vmem:[%s621] sm:$0xff]
      %624 = vset.pattern.permute.xlu0 0
      %625 = vperm.xlu0 %624, %v604
      %v626 = vpop.permute.xlu0 %625
      %v628 = vmul.f32 %v626, %v622
      %630 = vrot.lane.b32.xlu0 %v515, 120
      %v631 = vpop.permute.xlu0 %630
      %v634 = vsel %vm329, %v612, 0
      %636 = vmatprep.subr.mxu0 0.0
      %637 = vmatpush1.msra.mxu0 %v631
      %638 = vmatprep.subr.mxu0 0.0
      %639 = vmatpush1.msra.mxu0 0.0
      %640 = vmatprep.subr.mxu0 0.0
      %641 = vmatpush1.msra.mxu0 0.0
      %642 = vmatprep.subr.mxu0 0.0
      %643 = vmatpush1.msra.mxu0 0.0
      %644 = vmatprep.subr.mxu0 0.0
      %645 = vmatpush1.msra.mxu0 0.0
      %646 = vmatprep.subr.mxu0 0.0
      %647 = vmatpush1.msra.mxu0 0.0
      %648 = vmatprep.subr.mxu0 0.0
      %649 = vmatpush1.msra.mxu0 0.0
      %650 = vmatprep.subr.mxu0 0.0
      %651 = vmatpush1.msra.mxu0 0.0
      %652 = vmatprep.subr.mxu0 0.0
      %653 = vmatpush1.msra.mxu0 0.0
      %654 = vmatprep.subr.mxu0 0.0
      %655 = vmatpush1.msra.mxu0 0.0
      %656 = vmatprep.subr.mxu0 0.0
      %657 = vmatpush1.msra.mxu0 0.0
      %658 = vmatprep.subr.mxu0 0.0
      %659 = vmatpush1.msra.mxu0 0.0
      %660 = vmatprep.subr.mxu0 0.0
      %661 = vmatpush1.msra.mxu0 0.0
      %662 = vmatprep.subr.mxu0 0.0
      %663 = vmatpush1.msra.mxu0 0.0
      %664 = vmatprep.subr.mxu0 0.0
      %665 = vmatpush1.msra.mxu0 0.0
      %666 = vmatprep.subr.mxu0 0.0
      %667 = vmatpush1.msra.mxu0 0.0
      %668 = vmatprep.subr.mxu0 0.0
      %669 = vmatpush1.msra.mxu0 0.0
      %670 = vmatprep.subr.mxu0 0.0
      %671 = vmatpush1.msra.mxu0 0.0
      %672 = vmatprep.subr.mxu0 0.0
      %673 = vmatpush1.msra.mxu0 0.0
      %674 = vmatprep.subr.mxu0 0.0
      %675 = vmatpush1.msra.mxu0 0.0
      %676 = vmatprep.subr.mxu0 0.0
      %677 = vmatpush1.msra.mxu0 0.0
      %678 = vmatprep.subr.mxu0 0.0
      %679 = vmatpush1.msra.mxu0 0.0
      %680 = vmatprep.subr.mxu0 0.0
      %681 = vmatpush1.msra.mxu0 0.0
      %682 = vmatprep.subr.mxu0 0.0
      %683 = vmatpush1.msra.mxu0 0.0
      %684 = vmatprep.subr.mxu0 0.0
      %685 = vmatpush1.msra.mxu0 0.0
      %686 = vmatprep.subr.mxu0 0.0
      %687 = vmatpush1.msra.mxu0 0.0
      %688 = vmatprep.subr.mxu0 0.0
      %689 = vmatpush1.msra.mxu0 0.0
      %690 = vmatprep.subr.mxu0 0.0
      %691 = vmatpush1.msra.mxu0 0.0
      %692 = vmatprep.subr.mxu0 0.0
      %693 = vmatpush1.msra.mxu0 0.0
      %694 = vmatprep.subr.mxu0 0.0
      %695 = vmatpush1.msra.mxu0 0.0
      %696 = vmatprep.subr.mxu0 0.0
      %697 = vmatpush1.msra.mxu0 0.0
      %698 = vmatprep.subr.mxu0 0.0
      %699 = vmatpush1.msra.mxu0 0.0
      %700 = vmatprep.mubr.f32.mxu0 0.0
      %701 = vmatmul.mubr.f32.gmra.mrb[0].mxu0 %v634
      %v702 = vpop.f32.mrb[0].mxu0
      %v703 = vadd.f32 0.0, %v702
      %v704 = vpop.f32.mrb[0].mxu0
      %705 = vdwg.mxu0
      %v706 = vadd.f32 %v628, %v703
      %707 = vst.msk [vmem:[%s621] sm:$0xff] %vm329, %v706
      %708 = vst.msk [vmem:[%s596] sm:$0xff] %vm428, %v601
      %v709 = vld [vmem:[%s277] sm:$0xff]
      %v710 = vld [vmem:[%s287] sm:$0xff]
      %v711 = vld [vmem:[%s297] sm:$0xff]
      %713 = vrot.lane.b32.xlu0 %v709, 112
      %v714 = vpop.permute.xlu0 %713
      %716 = vrot.lane.b32.xlu0 %v710, 112
      %v717 = vpop.permute.xlu0 %716
      %v718 = vsel %vm329, %v714, 0
      %v720 = vsel %vm329, %v717, 0
      %722 = vmatprep.subr.mxu0 0.0
      %723 = vmatpush1.xpose.msra.mxu0 %v720
      %724 = vmatprep.subr.mxu0 0.0
      %725 = vmatpush1.xpose.msra.mxu0 0.0
      %726 = vmatprep.subr.mxu0 0.0
      %727 = vmatpush1.xpose.msra.mxu0 0.0
      %728 = vmatprep.subr.mxu0 0.0
      %729 = vmatpush1.xpose.msra.mxu0 0.0
      %730 = vmatprep.subr.mxu0 0.0
      %731 = vmatpush1.xpose.msra.mxu0 0.0
      %732 = vmatprep.subr.mxu0 0.0
      %733 = vmatpush1.xpose.msra.mxu0 0.0
      %734 = vmatprep.subr.mxu0 0.0
      %735 = vmatpush1.xpose.msra.mxu0 0.0
      %736 = vmatprep.subr.mxu0 0.0
      %737 = vmatpush1.xpose.msra.mxu0 0.0
      %738 = vmatprep.subr.mxu0 0.0
      %739 = vmatpush1.xpose.msra.mxu0 0.0
      %740 = vmatprep.subr.mxu0 0.0
      %741 = vmatpush1.xpose.msra.mxu0 0.0
      %742 = vmatprep.subr.mxu0 0.0
      %743 = vmatpush1.xpose.msra.mxu0 0.0
      %744 = vmatprep.subr.mxu0 0.0
      %745 = vmatpush1.xpose.msra.mxu0 0.0
      %746 = vmatprep.subr.mxu0 0.0
      %747 = vmatpush1.xpose.msra.mxu0 0.0
      %748 = vmatprep.subr.mxu0 0.0
      %749 = vmatpush1.xpose.msra.mxu0 0.0
      %750 = vmatprep.subr.mxu0 0.0
      %751 = vmatpush1.xpose.msra.mxu0 0.0
      %752 = vmatprep.subr.mxu0 0.0
      %753 = vmatpush1.xpose.msra.mxu0 0.0
      %754 = vmatprep.subr.mxu0 0.0
      %755 = vmatpush1.xpose.msra.mxu0 0.0
      %756 = vmatprep.subr.mxu0 0.0
      %757 = vmatpush1.xpose.msra.mxu0 0.0
      %758 = vmatprep.subr.mxu0 0.0
      %759 = vmatpush1.xpose.msra.mxu0 0.0
      %760 = vmatprep.subr.mxu0 0.0
      %761 = vmatpush1.xpose.msra.mxu0 0.0
      %762 = vmatprep.subr.mxu0 0.0
      %763 = vmatpush1.xpose.msra.mxu0 0.0
      %764 = vmatprep.subr.mxu0 0.0
      %765 = vmatpush1.xpose.msra.mxu0 0.0
      %766 = vmatprep.subr.mxu0 0.0
      %767 = vmatpush1.xpose.msra.mxu0 0.0
      %768 = vmatprep.subr.mxu0 0.0
      %769 = vmatpush1.xpose.msra.mxu0 0.0
      %770 = vmatprep.subr.mxu0 0.0
      %771 = vmatpush1.xpose.msra.mxu0 0.0
      %772 = vmatprep.subr.mxu0 0.0
      %773 = vmatpush1.xpose.msra.mxu0 0.0
      %774 = vmatprep.subr.mxu0 0.0
      %775 = vmatpush1.xpose.msra.mxu0 0.0
      %776 = vmatprep.subr.mxu0 0.0
      %777 = vmatpush1.xpose.msra.mxu0 0.0
      %778 = vmatprep.subr.mxu0 0.0
      %779 = vmatpush1.xpose.msra.mxu0 0.0
      %780 = vmatprep.subr.mxu0 0.0
      %781 = vmatpush1.xpose.msra.mxu0 0.0
      %782 = vmatprep.subr.mxu0 0.0
      %783 = vmatpush1.xpose.msra.mxu0 0.0
      %784 = vmatprep.subr.mxu0 0.0
      %785 = vmatpush1.xpose.msra.mxu0 0.0
      %786 = vmatprep.mubr.f32.mxu0 0.0
      %787 = vmatmul.mubr.f32.gmra.mrb[0].mxu0 %v718
      %v788 = vpop.f32.mrb[0].mxu0
      %v789 = vadd.f32 0.0, %v788
      %v790 = vpop.f32.mrb[0].mxu0
      %791 = vdwg.mxu0
      %s792 = scalar_lea.vmem [#allocation2], 16
      %v793 = vld [vmem:[%s792] sm:$0xff]
      %v794 = vsel %vm329, %v789, -inf
      %795 = vmax.xlane.f32.xlu0 %v794
      %v796 = vpop.xlane.xlu0 %795
      %v797 = vmax.f32 %v793, %v796
      %v798 = vsub.f32 %v793, %v797
      %v799 = vmul.f32 %v798, 1.442695
      %v800 = vpow.pop %v799
      %802 = vset.pattern.permute.xlu0 0
      %803 = vperm.xlu0 %802, %v797
      %v804 = vpop.permute.xlu0 %803
      %v806 = vsub.f32 %v789, %v804
      %v807 = vmul.f32 %v806, 1.442695
      %v808 = vpow.pop %v807
      %s809 = scalar_lea.vmem [#allocation3], 16
      %v810 = vld [vmem:[%s809] sm:$0xff]
      %v811 = vmul.f32 %v800, %v810
      %v812 = vsel %vm329, %v808, 0.0
      %813 = vadd.xlane.f32.xlu0 %v812
      %v814 = vpop.xlane.xlu0 %813
      %v815 = vadd.f32 %v811, %v814
      %816 = vst.msk [vmem:[%s809] sm:$0xff] %vm428, %v815
      %s817 = scalar_lea.vmem [#allocation4], 16
      %v818 = vld [vmem:[%s817] sm:$0xff]
      %820 = vset.pattern.permute.xlu0 0
      %821 = vperm.xlu0 %820, %v800
      %v822 = vpop.permute.xlu0 %821
      %v824 = vmul.f32 %v822, %v818
      %826 = vrot.lane.b32.xlu0 %v711, 112
      %v827 = vpop.permute.xlu0 %826
      %v830 = vsel %vm329, %v808, 0
      %832 = vmatprep.subr.mxu0 0.0
      %833 = vmatpush1.msra.mxu0 %v827
      %834 = vmatprep.subr.mxu0 0.0
      %835 = vmatpush1.msra.mxu0 0.0
      %836 = vmatprep.subr.mxu0 0.0
      %837 = vmatpush1.msra.mxu0 0.0
      %838 = vmatprep.subr.mxu0 0.0
      %839 = vmatpush1.msra.mxu0 0.0
      %840 = vmatprep.subr.mxu0 0.0
      %841 = vmatpush1.msra.mxu0 0.0
      %842 = vmatprep.subr.mxu0 0.0
      %843 = vmatpush1.msra.mxu0 0.0
      %844 = vmatprep.subr.mxu0 0.0
      %845 = vmatpush1.msra.mxu0 0.0
      %846 = vmatprep.subr.mxu0 0.0
      %847 = vmatpush1.msra.mxu0 0.0
      %848 = vmatprep.subr.mxu0 0.0
      %849 = vmatpush1.msra.mxu0 0.0
      %850 = vmatprep.subr.mxu0 0.0
      %851 = vmatpush1.msra.mxu0 0.0
      %852 = vmatprep.subr.mxu0 0.0
      %853 = vmatpush1.msra.mxu0 0.0
      %854 = vmatprep.subr.mxu0 0.0
      %855 = vmatpush1.msra.mxu0 0.0
      %856 = vmatprep.subr.mxu0 0.0
      %857 = vmatpush1.msra.mxu0 0.0
      %858 = vmatprep.subr.mxu0 0.0
      %859 = vmatpush1.msra.mxu0 0.0
      %860 = vmatprep.subr.mxu0 0.0
      %861 = vmatpush1.msra.mxu0 0.0
      %862 = vmatprep.subr.mxu0 0.0
      %863 = vmatpush1.msra.mxu0 0.0
      %864 = vmatprep.subr.mxu0 0.0
      %865 = vmatpush1.msra.mxu0 0.0
      %866 = vmatprep.subr.mxu0 0.0
      %867 = vmatpush1.msra.mxu0 0.0
      %868 = vmatprep.subr.mxu0 0.0
      %869 = vmatpush1.msra.mxu0 0.0
      %870 = vmatprep.subr.mxu0 0.0
      %871 = vmatpush1.msra.mxu0 0.0
      %872 = vmatprep.subr.mxu0 0.0
      %873 = vmatpush1.msra.mxu0 0.0
      %874 = vmatprep.subr.mxu0 0.0
      %875 = vmatpush1.msra.mxu0 0.0
      %876 = vmatprep.subr.mxu0 0.0
      %877 = vmatpush1.msra.mxu0 0.0
      %878 = vmatprep.subr.mxu0 0.0
      %879 = vmatpush1.msra.mxu0 0.0
      %880 = vmatprep.subr.mxu0 0.0
      %881 = vmatpush1.msra.mxu0 0.0
      %882 = vmatprep.subr.mxu0 0.0
      %883 = vmatpush1.msra.mxu0 0.0
      %884 = vmatprep.subr.mxu0 0.0
      %885 = vmatpush1.msra.mxu0 0.0
      %886 = vmatprep.subr.mxu0 0.0
      %887 = vmatpush1.msra.mxu0 0.0
      %888 = vmatprep.subr.mxu0 0.0
      %889 = vmatpush1.msra.mxu0 0.0
      %890 = vmatprep.subr.mxu0 0.0
      %891 = vmatpush1.msra.mxu0 0.0
      %892 = vmatprep.subr.mxu0 0.0
      %893 = vmatpush1.msra.mxu0 0.0
      %894 = vmatprep.subr.mxu0 0.0
      %895 = vmatpush1.msra.mxu0 0.0
      %896 = vmatprep.mubr.f32.mxu0 0.0
      %897 = vmatmul.mubr.f32.gmra.mrb[0].mxu0 %v830
      %v898 = vpop.f32.mrb[0].mxu0
      %v899 = vadd.f32 0.0, %v898
      %v900 = vpop.f32.mrb[0].mxu0
      %901 = vdwg.mxu0
      %v902 = vadd.f32 %v824, %v899
      %903 = vst.msk [vmem:[%s817] sm:$0xff] %vm329, %v902
      %904 = vst.msk [vmem:[%s792] sm:$0xff] %vm428, %v797
      %v905 = vld [vmem:[%s277] sm:$0xff]
      %v906 = vld [vmem:[%s287] sm:$0xff]
      %v907 = vld [vmem:[%s297] sm:$0xff]
      %909 = vrot.lane.b32.xlu0 %v905, 104
      %v910 = vpop.permute.xlu0 %909
      %912 = vrot.lane.b32.xlu0 %v906, 104
      %v913 = vpop.permute.xlu0 %912
      %v914 = vsel %vm329, %v910, 0
      %v916 = vsel %vm329, %v913, 0
      %918 = vmatprep.subr.mxu0 0.0
      %919 = vmatpush1.xpose.msra.mxu0 %v916
      %920 = vmatprep.subr.mxu0 0.0
      %921 = vmatpush1.xpose.msra.mxu0 0.0
      %922 = vmatprep.subr.mxu0 0.0
      %923 = vmatpush1.xpose.msra.mxu0 0.0
      %924 = vmatprep.subr.mxu0 0.0
      %925 = vmatpush1.xpose.msra.mxu0 0.0
      %926 = vmatprep.subr.mxu0 0.0
      %927 = vmatpush1.xpose.msra.mxu0 0.0
      %928 = vmatprep.subr.mxu0 0.0
      %929 = vmatpush1.xpose.msra.mxu0 0.0
      %930 = vmatprep.subr.mxu0 0.0
      %931 = vmatpush1.xpose.msra.mxu0 0.0
      %932 = vmatprep.subr.mxu0 0.0
      %933 = vmatpush1.xpose.msra.mxu0 0.0
      %934 = vmatprep.subr.mxu0 0.0
      %935 = vmatpush1.xpose.msra.mxu0 0.0
      %936 = vmatprep.subr.mxu0 0.0
      %937 = vmatpush1.xpose.msra.mxu0 0.0
      %938 = vmatprep.subr.mxu0 0.0
      %939 = vmatpush1.xpose.msra.mxu0 0.0
      %940 = vmatprep.subr.mxu0 0.0
      %941 = vmatpush1.xpose.msra.mxu0 0.0
      %942 = vmatprep.subr.mxu0 0.0
      %943 = vmatpush1.xpose.msra.mxu0 0.0
      %944 = vmatprep.subr.mxu0 0.0
      %945 = vmatpush1.xpose.msra.mxu0 0.0
      %946 = vmatprep.subr.mxu0 0.0
      %947 = vmatpush1.xpose.msra.mxu0 0.0
      %948 = vmatprep.subr.mxu0 0.0
      %949 = vmatpush1.xpose.msra.mxu0 0.0
      %950 = vmatprep.subr.mxu0 0.0
      %951 = vmatpush1.xpose.msra.mxu0 0.0
      %952 = vmatprep.subr.mxu0 0.0
      %953 = vmatpush1.xpose.msra.mxu0 0.0
      %954 = vmatprep.subr.mxu0 0.0
      %955 = vmatpush1.xpose.msra.mxu0 0.0
      %956 = vmatprep.subr.mxu0 0.0
      %957 = vmatpush1.xpose.msra.mxu0 0.0
      %958 = vmatprep.subr.mxu0 0.0
      %959 = vmatpush1.xpose.msra.mxu0 0.0
      %960 = vmatprep.subr.mxu0 0.0
      %961 = vmatpush1.xpose.msra.mxu0 0.0
      %962 = vmatprep.subr.mxu0 0.0
      %963 = vmatpush1.xpose.msra.mxu0 0.0
      %964 = vmatprep.subr.mxu0 0.0
      %965 = vmatpush1.xpose.msra.mxu0 0.0
      %966 = vmatprep.subr.mxu0 0.0
      %967 = vmatpush1.xpose.msra.mxu0 0.0
      %968 = vmatprep.subr.mxu0 0.0
      %969 = vmatpush1.xpose.msra.mxu0 0.0
      %970 = vmatprep.subr.mxu0 0.0
      %971 = vmatpush1.xpose.msra.mxu0 0.0
      %972 = vmatprep.subr.mxu0 0.0
      %973 = vmatpush1.xpose.msra.mxu0 0.0
      %974 = vmatprep.subr.mxu0 0.0
      %975 = vmatpush1.xpose.msra.mxu0 0.0
      %976 = vmatprep.subr.mxu0 0.0
      %977 = vmatpush1.xpose.msra.mxu0 0.0
      %978 = vmatprep.subr.mxu0 0.0
      %979 = vmatpush1.xpose.msra.mxu0 0.0
      %980 = vmatprep.subr.mxu0 0.0
      %981 = vmatpush1.xpose.msra.mxu0 0.0
      %982 = vmatprep.mubr.f32.mxu0 0.0
      %983 = vmatmul.mubr.f32.gmra.mrb[0].mxu0 %v914
      %v984 = vpop.f32.mrb[0].mxu0
      %v985 = vadd.f32 0.0, %v984
      %v986 = vpop.f32.mrb[0].mxu0
      %987 = vdwg.mxu0
      %s988 = scalar_lea.vmem [#allocation2], 24
      %v989 = vld [vmem:[%s988] sm:$0xff]
      %v990 = vsel %vm329, %v985, -inf
      %991 = vmax.xlane.f32.xlu0 %v990
      %v992 = vpop.xlane.xlu0 %991
      %v993 = vmax.f32 %v989, %v992
      %v994 = vsub.f32 %v989, %v993
      %v995 = vmul.f32 %v994, 1.442695
      %v996 = vpow.pop %v995
      %998 = vset.pattern.permute.xlu0 0
      %999 = vperm.xlu0 %998, %v993
      %v1000 = vpop.permute.xlu0 %999
      %v1002 = vsub.f32 %v985, %v1000
      %v1003 = vmul.f32 %v1002, 1.442695
      %v1004 = vpow.pop %v1003
      %s1005 = scalar_lea.vmem [#allocation3], 24
      %v1006 = vld [vmem:[%s1005] sm:$0xff]
      %v1007 = vmul.f32 %v996, %v1006
      %v1008 = vsel %vm329, %v1004, 0.0
      %1009 = vadd.xlane.f32.xlu0 %v1008
      %v1010 = vpop.xlane.xlu0 %1009
      %v1011 = vadd.f32 %v1007, %v1010
      %1012 = vst.msk [vmem:[%s1005] sm:$0xff] %vm428, %v1011
      %s1013 = scalar_lea.vmem [#allocation4], 24
      %v1014 = vld [vmem:[%s1013] sm:$0xff]
      %1016 = vset.pattern.permute.xlu0 0
      %1017 = vperm.xlu0 %1016, %v996
      %v1018 = vpop.permute.xlu0 %1017
      %v1020 = vmul.f32 %v1018, %v1014
      %1022 = vrot.lane.b32.xlu0 %v907, 104
      %v1023 = vpop.permute.xlu0 %1022
      %v1026 = vsel %vm329, %v1004, 0
      %1028 = vmatprep.subr.mxu0 0.0
      %1029 = vmatpush1.msra.mxu0 %v1023
      %1030 = vmatprep.subr.mxu0 0.0
      %1031 = vmatpush1.msra.mxu0 0.0
      %1032 = vmatprep.subr.mxu0 0.0
      %1033 = vmatpush1.msra.mxu0 0.0
      %1034 = vmatprep.subr.mxu0 0.0
      %1035 = vmatpush1.msra.mxu0 0.0
      %1036 = vmatprep.subr.mxu0 0.0
      %1037 = vmatpush1.msra.mxu0 0.0
      %1038 = vmatprep.subr.mxu0 0.0
      %1039 = vmatpush1.msra.mxu0 0.0
      %1040 = vmatprep.subr.mxu0 0.0
      %1041 = vmatpush1.msra.mxu0 0.0
      %1042 = vmatprep.subr.mxu0 0.0
      %1043 = vmatpush1.msra.mxu0 0.0
      %1044 = vmatprep.subr.mxu0 0.0
      %1045 = vmatpush1.msra.mxu0 0.0
      %1046 = vmatprep.subr.mxu0 0.0
      %1047 = vmatpush1.msra.mxu0 0.0
      %1048 = vmatprep.subr.mxu0 0.0
      %1049 = vmatpush1.msra.mxu0 0.0
      %1050 = vmatprep.subr.mxu0 0.0
      %1051 = vmatpush1.msra.mxu0 0.0
      %1052 = vmatprep.subr.mxu0 0.0
      %1053 = vmatpush1.msra.mxu0 0.0
      %1054 = vmatprep.subr.mxu0 0.0
      %1055 = vmatpush1.msra.mxu0 0.0
      %1056 = vmatprep.subr.mxu0 0.0
      %1057 = vmatpush1.msra.mxu0 0.0
      %1058 = vmatprep.subr.mxu0 0.0
      %1059 = vmatpush1.msra.mxu0 0.0
      %1060 = vmatprep.subr.mxu0 0.0
      %1061 = vmatpush1.msra.mxu0 0.0
      %1062 = vmatprep.subr.mxu0 0.0
      %1063 = vmatpush1.msra.mxu0 0.0
      %1064 = vmatprep.subr.mxu0 0.0
      %1065 = vmatpush1.msra.mxu0 0.0
      %1066 = vmatprep.subr.mxu0 0.0
      %1067 = vmatpush1.msra.mxu0 0.0
      %1068 = vmatprep.subr.mxu0 0.0
      %1069 = vmatpush1.msra.mxu0 0.0
      %1070 = vmatprep.subr.mxu0 0.0
      %1071 = vmatpush1.msra.mxu0 0.0
      %1072 = vmatprep.subr.mxu0 0.0
      %1073 = vmatpush1.msra.mxu0 0.0
      %1074 = vmatprep.subr.mxu0 0.0
      %1075 = vmatpush1.msra.mxu0 0.0
      %1076 = vmatprep.subr.mxu0 0.0
      %1077 = vmatpush1.msra.mxu0 0.0
      %1078 = vmatprep.subr.mxu0 0.0
      %1079 = vmatpush1.msra.mxu0 0.0
      %1080 = vmatprep.subr.mxu0 0.0
      %1081 = vmatpush1.msra.mxu0 0.0
      %1082 = vmatprep.subr.mxu0 0.0
      %1083 = vmatpush1.msra.mxu0 0.0
      %1084 = vmatprep.subr.mxu0 0.0
      %1085 = vmatpush1.msra.mxu0 0.0
      %1086 = vmatprep.subr.mxu0 0.0
      %1087 = vmatpush1.msra.mxu0 0.0
      %1088 = vmatprep.subr.mxu0 0.0
      %1089 = vmatpush1.msra.mxu0 0.0
      %1090 = vmatprep.subr.mxu0 0.0
      %1091 = vmatpush1.msra.mxu0 0.0
      %1092 = vmatprep.mubr.f32.mxu0 0.0
      %1093 = vmatmul.mubr.f32.gmra.mrb[0].mxu0 %v1026
      %v1094 = vpop.f32.mrb[0].mxu0
      %v1095 = vadd.f32 0.0, %v1094
      %v1096 = vpop.f32.mrb[0].mxu0
      %1097 = vdwg.mxu0
      %v1098 = vadd.f32 %v1020, %v1095
      %1099 = vst.msk [vmem:[%s1013] sm:$0xff] %vm329, %v1098
      %1100 = vst.msk [vmem:[%s988] sm:$0xff] %vm428, %v993
      // Predicated region
      $region37: #{multi_head_attention.4} parent=31 // pred_check
        %p1101 = pneg %p308
      $region38: #{multi_head_attention.4} parent=31 // pred_check_branch
        %1103 = sbr.rel (%p1101) target = $region40
      $region39: #{multi_head_attention.4} parent=31 // pred_region
        %v1104 = vld [vmem:[#allocation3] sm:$0xff]
        %v1105 = vrcp.pop %v1104
        %v1106 = vld [vmem:[#allocation4] sm:$0xff]
        %1108 = vset.pattern.permute.xlu0 0
        %1109 = vperm.xlu0 %1108, %v1105
        %v1110 = vpop.permute.xlu0 %1109
        %v1112 = vmul.f32 %v1106, %v1110
        %1113 = vst.msk [vmem:[%s307] sm:$0xff] %vm329, %v1112
        %v1114 = vld [vmem:[%s613] sm:$0xff]
        %v1115 = vrcp.pop %v1114
        %v1116 = vld [vmem:[%s621] sm:$0xff]
        %1118 = vset.pattern.permute.xlu0 0
        %1119 = vperm.xlu0 %1118, %v1115
        %v1120 = vpop.permute.xlu0 %1119
        %v1122 = vmul.f32 %v1116, %v1120
        %1124 = vrot.lane.b32.xlu0 %v1122, 8
        %v1125 = vpop.permute.xlu0 %1124
        %vm1127 = vcmask 130112
        %1128 = vst.msk [vmem:[%s307] sm:$0xff] %vm1127, %v1125
        %v1129 = vld [vmem:[%s809] sm:$0xff]
        %v1130 = vrcp.pop %v1129
        %v1131 = vld [vmem:[%s817] sm:$0xff]
        %1133 = vset.pattern.permute.xlu0 0
        %1134 = vperm.xlu0 %1133, %v1130
        %v1135 = vpop.permute.xlu0 %1134
        %v1137 = vmul.f32 %v1131, %v1135
        %1139 = vrot.lane.b32.xlu0 %v1137, 16
        %v1140 = vpop.permute.xlu0 %1139
        %vm1142 = vcmask 195712
        %1143 = vst.msk [vmem:[%s307] sm:$0xff] %vm1142, %v1140
        %v1144 = vld [vmem:[%s1005] sm:$0xff]
        %v1145 = vrcp.pop %v1144
        %v1146 = vld [vmem:[%s1013] sm:$0xff]
        %1148 = vset.pattern.permute.xlu0 0
        %1149 = vperm.xlu0 %1148, %v1145
        %v1150 = vpop.permute.xlu0 %1149
        %v1152 = vmul.f32 %v1146, %v1150
        %1154 = vrot.lane.b32.xlu0 %v1152, 24
        %v1155 = vpop.permute.xlu0 %1154
        %vm1157 = vcmask 261312
        %1158 = vst.msk [vmem:[%s307] sm:$0xff] %vm1157, %v1155
      $region40: #{multi_head_attention.4} parent=31 // pred_fallthru
        _
      %p1159 = scmp.lt.s32.totalorder %s20, 1
      %s1160 = scalar_select %p1159, %s20, 1
      %p1161 = scmp.lt.s32.totalorder %s22, 0
      %s1162 = scalar_select %p1161, %s22, 0
      %p1163 = scmp.lt.s32.totalorder %s21, 0
      %s1164 = scalar_select %p1163, %s21, 0
      %s1165 = sadd.s32 %s1164, %s1162
      %s1166 = sadd.s32 %s1165, %s1160
      %s1167 = smul.addr %s1166, 8
      %s1168 = scalar_lea.vmem %s3, %s1167
      // Predicated region
      $region41: #{multi_head_attention.4} parent=31 // pred_check
        %p1169 = pneg %p152
      $region42: #{multi_head_attention.4} parent=31 // pred_check_branch
        %1171 = sbr.rel (%p1169) target = $region44
      $region43: #{multi_head_attention.4} parent=31 // pred_region
        _
      $region44: #{multi_head_attention.4} parent=31 // pred_fallthru
        _
    $region32: #{multi_head_attention.4} parent=5 // pred_fallthru
      _
    %p1172 = scmp.le.s32.totalorder 2, %s9
    // Predicated region
    $region45: #{multi_head_attention.4} parent=5 // pred_check
      %p1173 = pneg %p1172
    $region46: #{multi_head_attention.4} parent=5 // pred_check_branch
      %1175 = sbr.rel (%p1173) target = $region48
    $region47: #{multi_head_attention.4} parent=5 // pred_region
      %s1176 = ssub.s32 %s9, 2
      // Predicated region
      $region49: #{multi_head_attention.4} parent=47 // pred_check
        %p1177 = pneg %p158
      $region50: #{multi_head_attention.4} parent=47 // pred_check_branch
        %1179 = sbr.rel (%p1177) target = $region52
      $region51: #{multi_head_attention.4} parent=47 // pred_region
        %p1180 = scmp.lt.s32.totalorder %s24, 1
        %s1181 = scalar_select %p1180, %s24, 1
        %p1182 = scmp.lt.s32.totalorder %s26, 0
        %s1183 = scalar_select %p1182, %s26, 0
        %p1184 = scmp.lt.s32.totalorder %s25, 0
        %s1185 = scalar_select %p1184, %s25, 0
        %s1186 = sadd.s32 %s1185, %s1183
        %s1187 = sadd.s32 %s1186, %s1181
        %s1188 = smul.addr %s1187, 8
        %s1189 = scalar_lea.vmem %s3, %s1188
      $region52: #{multi_head_attention.4} parent=47 // pred_fallthru
        _
    $region48: #{multi_head_attention.4} parent=5 // pred_fallthru
      _
  $region6: #{multi_head_attention.4} parent=0 // loop_footer
    %s13 = sadd.s32 1, %s9
  $region7: #{multi_head_attention.4} parent=0 // loop_footer_branch
    %8 = sbr.rel target = $region3
  $region8: #{multi_head_attention.4} parent=0 // loop_exit
    _

</llo_original>
